<compile_context>
chip_gen: v7x
topology: tpu7x:2x2x1
jax: 0.10.0
libtpu: 0.0.40
codegen_flags: <defaults>
</compile_context>

<pallas_src>
import functools

import jax
import jax.numpy as jnp
from jax.experimental import pallas as pl
from jax.experimental.pallas import tpu as pltpu


def _round_up(x, m):
    return (x + m - 1) // m * m


def _mha_kernel(q_ref, kv_ref, bias_ref,
                wq_ref, bq_ref, wkv_ref, bkv_ref, wo_ref, bo_ref,
                selk_ref, selv_ref,
                out_ref):
    f32 = jnp.float32
    TB = q_ref.shape[0]          # batch tile
    N = bias_ref.shape[1]        # neighbors
    H = selk_ref.shape[1]        # heads
    E = wo_ref.shape[1]          # embed dim
    E2 = wq_ref.shape[1]         # 2*E (fused K|V lane layout)

    kv = kv_ref[...]             # [TB*N, K]  (bf16)
    bias = bias_ref[...]         # [TB, N]    additive -1e30 mask (f32)

    # ---- fused projections (weights pre-transposed / pre-scaled / zero-padded) ----
    # q:   [TB, 2E]   lanes [0:E] = scaled query proj, lanes [E:2E] = 0
    # kvp: [TB*N, 2E] lanes [0:E] = K proj,            lanes [E:2E] = V proj
    q = jnp.dot(q_ref[...], wq_ref[...], preferred_element_type=f32) + bq_ref[...]
    kvp = jnp.dot(kv, wkv_ref[...], preferred_element_type=f32) + bkv_ref[...]
    kvp3 = kvp.reshape(TB, N, E2)                       # benign reshape (last dim kept)

    # ---- per-head scores: broadcast q over neighbors, head-selector matmul ----
    prod = q[:, None, :] * kvp3                          # [TB, N, 2E] (V lanes zeroed by q)
    s = jnp.dot(prod.reshape(TB * N, E2), selk_ref[...],
                preferred_element_type=f32)              # [TB*N, H]
    s = s.reshape(TB, N, H) + bias[:, :, None]           # benign reshape (N % 8 == 0)

    # ---- masked softmax over neighbors (axis=1), per head, all f32 ----
    m = jnp.max(s, axis=1)                               # [TB, H]
    p = jnp.exp(s - m[:, None, :])                       # [TB, N, H]
    denom = jnp.sum(p, axis=1)                           # [TB, H]
    p = p * pl.reciprocal(denom, approx=True)[:, None, :]

    # ---- head-averaged attention weights ----
    w = jnp.sum(p, axis=-1) * (1.0 / H)                  # [TB, N]

    # ---- context: expand head probs across that head's V lanes, weight V,
    #      neighbor segment-sum as a sublane reduce (no gather matmul) ----
    p_exp = jnp.dot(p.reshape(TB * N, H), selv_ref[...],
                    preferred_element_type=f32)          # [TB*N, 2E] (only V lanes nonzero)
    ctx = jnp.sum(p_exp.reshape(TB, N, E2) * kvp3, axis=1)   # [TB, 2E]

    out = jnp.dot(ctx, wo_ref[...], preferred_element_type=f32) + bo_ref[...]    # [TB, E]

    # ---- single merged writeback block: [ attn_output | attn_weights ] ----
    out_ref[...] = jnp.concatenate([out, w], axis=-1)    # [TB, E+N]


@functools.partial(jax.jit, static_argnames=("n_head", "block_b"))
def temporal_attention_forward(src_time_features, neighbors_features,
                               neighbors_time_features, neighbors_padding_mask,
                               params, n_head=2, block_b=512):
    f32 = jnp.float32
    bf16 = jnp.bfloat16
    B, _, E = src_time_features.shape
    N = neighbors_features.shape[1]
    K = neighbors_features.shape[2] + neighbors_time_features.shape[2]
    H = n_head
    Dh = E // H
    scale = 1.0 / float(Dh) ** 0.5

    # ---- batch tiling: 8-aligned; keep >=2 grid steps when possible (v7x: 2 TCs) ----
    TB = _round_up(min(block_b, _round_up(B, 8)), 8)
    if B > 8 and _round_up(B, TB) // TB < 2:
        TB = _round_up((B + 1) // 2, 8)
    Bp = _round_up(B, TB)
    pad_b = Bp - B

    # ---- HBM-side layout plumbing (fused by XLA, free for the kernel) ----
    q_in = src_time_features[:, 0, :].astype(f32)                                  # [B, E]
    kv = jnp.concatenate([neighbors_features, neighbors_time_features],
                         axis=2).astype(f32)                                       # [B, N, K]
    pad_mask = neighbors_padding_mask.astype(bool)
    invalid = jnp.all(pad_mask, axis=1, keepdims=True)                             # [B, 1]
    unmask0 = invalid & (jnp.arange(N)[None, :] == 0)                              # unmask neighbor 0
    neg_bias = jnp.where(pad_mask & ~unmask0, f32(-1e30), f32(0.0))                # [B, N]
    valid = (~invalid).astype(f32)          # applied outside the kernel (fused with slicing)

    if pad_b:
        q_in = jnp.pad(q_in, ((0, pad_b), (0, 0)))
        kv = jnp.pad(kv, ((0, pad_b), (0, 0), (0, 0)))
        neg_bias = jnp.pad(neg_bias, ((0, pad_b), (0, 0)))

    kv_flat = kv.reshape(Bp * N, K).astype(bf16)                                   # dominant HBM stream

    # ---- pre-transposed / pre-scaled / fused / zero-padded weights ----
    zeros_EE = jnp.zeros((E, E), f32)
    wq_pad = jnp.concatenate([params["wq"].T.astype(f32) * scale, zeros_EE], axis=1)   # [E, 2E]
    bq_pad = jnp.concatenate([params["bq"].astype(f32) * scale,
                              jnp.zeros((1, E), f32)], axis=1)                          # [1, 2E]
    wkv_t = jnp.concatenate([params["wk"].T, params["wv"].T], axis=1).astype(bf16)      # [K, 2E]
    bkv = jnp.concatenate([params["bk"], params["bv"]], axis=1).astype(f32)             # [1, 2E]
    wo_pad = jnp.concatenate([zeros_EE, params["wo"].T.astype(f32)], axis=0)            # [2E, E]
    bo = params["bo"].astype(f32)                                                       # [1, E]

    # ---- tiny constant head-selector matrices (ride the MXU) ----
    head_sel = (jnp.arange(E)[:, None] // Dh == jnp.arange(H)[None, :]).astype(f32)     # [E, H]
    sel_k = jnp.concatenate([head_sel, jnp.zeros((E, H), f32)], axis=0)                 # [2E, H]
    selt_v = jnp.concatenate([jnp.zeros((H, E), f32), head_sel.T], axis=1)              # [H, 2E]

    batched = (q_in, kv_flat, neg_bias)
    consts = (wq_pad, bq_pad, wkv_t, bkv, wo_pad, bo, sel_k, selt_v)

    batched_specs = [
        pl.BlockSpec((TB, E), lambda i: (i, 0)),
        pl.BlockSpec((TB * N, K), lambda i: (i, 0)),
        pl.BlockSpec((TB, N), lambda i: (i, 0)),
    ]
    const_specs = [
        pl.BlockSpec(c.shape, lambda i, _nd=c.ndim: (0,) * _nd) for c in consts
    ]

    comb = pl.pallas_call(
        _mha_kernel,
        grid=(Bp // TB,),
        in_specs=batched_specs + const_specs,
        out_specs=pl.BlockSpec((TB, E + N), lambda i: (i, 0)),
        out_shape=jax.ShapeDtypeStruct((Bp, E + N), f32),
        compiler_params=pltpu.CompilerParams(
            dimension_semantics=("parallel",)),
    )(*batched, *consts)

    out = comb[:B, :E] * valid
    w = comb[:B, E:] * valid
    return out, w


def _reference(src_time, nbr_feat, nbr_time, pad_mask, params, n_head):
    """Pure-JAX reference mirroring torch nn.MultiheadAttention eval forward."""
    B, _, E = src_time.shape
    N = nbr_feat.shape[1]
    Dh = E // n_head
    kv = jnp.concatenate([nbr_feat, nbr_time], axis=2)
    q = src_time[:, 0, :] @ params["wq"].T + params["bq"][0]
    k = kv @ params["wk"].T + params["bk"][0]
    v = kv @ params["wv"].T + params["bv"][0]
    invalid = jnp.all(pad_mask, axis=1, keepdims=True)
    pad = pad_mask & ~(invalid & (jnp.arange(N)[None, :] == 0))
    q = q.reshape(B, n_head, Dh) / jnp.sqrt(Dh)
    k = k.reshape(B, N, n_head, Dh)
    v = v.reshape(B, N, n_head, Dh)
    scores = jnp.einsum("bhd,bnhd->bhn", q, k)
    scores = jnp.where(pad[:, None, :], -jnp.inf, scores)
    p = jax.nn.softmax(scores, axis=-1)
    attn = jnp.einsum("bhn,bnhd->bhd", p, v).reshape(B, E)
    out = attn @ params["wo"].T + params["bo"][0]
    w = p.mean(axis=1)
    valid = (~invalid).astype(out.dtype)
    return out * valid, w * valid


if __name__ == "__main__":
    # batch B=64, n_neighbors N=16, n_node_features F=32, time_dim E=32, n_head=2
    # block_b=16 -> a real 4-step batch grid is exercised.
    B, N, F, E, H = 64, 16, 32, 32, 2
    K = F + E

    key = jax.random.PRNGKey(0)
    keys = jax.random.split(key, 12)
    src_time = jax.random.normal(keys[0], (B, 1, E), jnp.float32)
    nbr_feat = jax.random.normal(keys[1], (B, N, F), jnp.float32)
    nbr_time = jax.random.normal(keys[2], (B, N, E), jnp.float32)
    pad_mask = jax.random.bernoulli(keys[3], 0.3, (B, N))
    pad_mask = pad_mask.at[B - 1, :].set(True)   # one fully-padded row -> invalid path

    params = dict(
        wq=0.1 * jax.random.normal(keys[4], (E, E), jnp.float32),
        wk=0.1 * jax.random.normal(keys[5], (E, K), jnp.float32),
        wv=0.1 * jax.random.normal(keys[6], (E, K), jnp.float32),
        bq=0.01 * jax.random.normal(keys[7], (1, E), jnp.float32),
        bk=0.01 * jax.random.normal(keys[8], (1, E), jnp.float32),
        bv=0.01 * jax.random.normal(keys[9], (1, E), jnp.float32),
        wo=0.1 * jax.random.normal(keys[10], (E, E), jnp.float32),
        bo=0.01 * jax.random.normal(keys[11], (1, E), jnp.float32),
    )

    out, w = temporal_attention_forward(src_time, nbr_feat, nbr_time, pad_mask,
                                        params, n_head=H, block_b=16)
    out, w = jax.block_until_ready((out, w))

    ref_out, ref_w = _reference(src_time, nbr_feat, nbr_time, pad_mask, params, H)
    assert out.shape == (B, E) and w.shape == (B, N)
    assert jnp.allclose(out, ref_out, atol=2e-2, rtol=2e-2), "attn_output mismatch"
    assert jnp.allclose(w, ref_w, atol=2e-2, rtol=2e-2), "attn_weights mismatch"

    print("KERNEL_OK")
</pallas_src>

<mosaic_0001>
module attributes {stable_mosaic.version = 11 : i64} {
  func.func @_mha_kernel(%arg0: i32, %arg1: memref<16x32xf32, #tpu.memory_space<vmem>>, %arg2: memref<256x64xbf16, #tpu.memory_space<vmem>>, %arg3: memref<16x16xf32, #tpu.memory_space<vmem>>, %arg4: memref<32x64xf32, #tpu.memory_space<vmem>>, %arg5: memref<1x64xf32, #tpu.memory_space<vmem>>, %arg6: memref<64x64xbf16, #tpu.memory_space<vmem>>, %arg7: memref<1x64xf32, #tpu.memory_space<vmem>>, %arg8: memref<64x32xf32, #tpu.memory_space<vmem>>, %arg9: memref<1x32xf32, #tpu.memory_space<vmem>>, %arg10: memref<64x2xf32, #tpu.memory_space<vmem>>, %arg11: memref<2x64xf32, #tpu.memory_space<vmem>>, %arg12: memref<16x48xf32, #tpu.memory_space<vmem>>) attributes {dimension_semantics = [#tpu.dimension_semantics<parallel>], iteration_bounds = array<i64: 4>, scalar_prefetch = 0 : i64, scratch_operands = 0 : i64, tpu.core_type = #tpu.core_type<tc>, window_params = [{transform_indices = @transform_0, window_bounds = array<i64: 16, 32>}, {transform_indices = @transform_1, window_bounds = array<i64: 256, 64>}, {transform_indices = @transform_2, window_bounds = array<i64: 16, 16>}, {pipeline_mode = #tpu.pipeline_mode<synchronous>, transform_indices = @transform_3, window_bounds = array<i64: 32, 64>}, {pipeline_mode = #tpu.pipeline_mode<synchronous>, transform_indices = @transform_4, window_bounds = array<i64: 1, 64>}, {pipeline_mode = #tpu.pipeline_mode<synchronous>, transform_indices = @transform_5, window_bounds = array<i64: 64, 64>}, {pipeline_mode = #tpu.pipeline_mode<synchronous>, transform_indices = @transform_6, window_bounds = array<i64: 1, 64>}, {pipeline_mode = #tpu.pipeline_mode<synchronous>, transform_indices = @transform_7, window_bounds = array<i64: 64, 32>}, {pipeline_mode = #tpu.pipeline_mode<synchronous>, transform_indices = @transform_8, window_bounds = array<i64: 1, 32>}, {pipeline_mode = #tpu.pipeline_mode<synchronous>, transform_indices = @transform_9, window_bounds = array<i64: 64, 2>}, {pipeline_mode = #tpu.pipeline_mode<synchronous>, transform_indices = @transform_10, window_bounds = array<i64: 2, 64>}, {transform_indices = @transform_11, window_bounds = array<i64: 16, 48>}]} {
    %c0 = arith.constant 0 : index
    %c0_0 = arith.constant 0 : index
    %0 = vector.load %arg2[%c0, %c0_0] : memref<256x64xbf16, #tpu.memory_space<vmem>>, vector<256x64xbf16>
    %c0_1 = arith.constant 0 : index
    %c0_2 = arith.constant 0 : index
    %1 = vector.load %arg3[%c0_1, %c0_2] : memref<16x16xf32, #tpu.memory_space<vmem>>, vector<16x16xf32>
    %c0_3 = arith.constant 0 : index
    %c0_4 = arith.constant 0 : index
    %2 = vector.load %arg1[%c0_3, %c0_4] : memref<16x32xf32, #tpu.memory_space<vmem>>, vector<16x32xf32>
    %c0_5 = arith.constant 0 : index
    %c0_6 = arith.constant 0 : index
    %3 = vector.load %arg4[%c0_5, %c0_6] : memref<32x64xf32, #tpu.memory_space<vmem>>, vector<32x64xf32>
    %cst = arith.constant dense<0.000000e+00> : vector<16x64xf32>
    %4 = tpu.matmul %2, %3, %cst {dimension_numbers = #tpu.dot_dimension_numbers<[1], [0], [0], [1], [0, 0, 1, 1], [], []>} : vector<16x32xf32>, vector<32x64xf32>, vector<16x64xf32> -> vector<16x64xf32>
    %c0_7 = arith.constant 0 : index
    %c0_8 = arith.constant 0 : index
    %5 = vector.load %arg5[%c0_7, %c0_8] : memref<1x64xf32, #tpu.memory_space<vmem>>, vector<1x64xf32>
    %6 = vector.broadcast %5 : vector<1x64xf32> to vector<16x64xf32>
    %7 = arith.addf %4, %6 : vector<16x64xf32>
    %c0_9 = arith.constant 0 : index
    %c0_10 = arith.constant 0 : index
    %8 = vector.load %arg6[%c0_9, %c0_10] : memref<64x64xbf16, #tpu.memory_space<vmem>>, vector<64x64xbf16>
    %cst_11 = arith.constant dense<0.000000e+00> : vector<256x64xf32>
    %9 = tpu.matmul %0, %8, %cst_11 {dimension_numbers = #tpu.dot_dimension_numbers<[1], [0], [0], [1], [0, 0, 1, 1], [], []>} : vector<256x64xbf16>, vector<64x64xbf16>, vector<256x64xf32> -> vector<256x64xf32>
    %c0_12 = arith.constant 0 : index
    %c0_13 = arith.constant 0 : index
    %10 = vector.load %arg7[%c0_12, %c0_13] : memref<1x64xf32, #tpu.memory_space<vmem>>, vector<1x64xf32>
    %11 = vector.broadcast %10 : vector<1x64xf32> to vector<256x64xf32>
    %12 = arith.addf %9, %11 : vector<256x64xf32>
    %13 = vector.shape_cast %12 : vector<256x64xf32> to vector<16x16x64xf32>
    %14 = vector.shape_cast %7 : vector<16x64xf32> to vector<16x1x64xf32>
    %15 = vector.broadcast %14 : vector<16x1x64xf32> to vector<16x16x64xf32>
    %16 = arith.mulf %15, %13 : vector<16x16x64xf32>
    %17 = vector.shape_cast %16 : vector<16x16x64xf32> to vector<256x64xf32>
    %c0_14 = arith.constant 0 : index
    %c0_15 = arith.constant 0 : index
    %18 = vector.load %arg10[%c0_14, %c0_15] : memref<64x2xf32, #tpu.memory_space<vmem>>, vector<64x2xf32>
    %cst_16 = arith.constant dense<0.000000e+00> : vector<256x2xf32>
    %19 = tpu.matmul %17, %18, %cst_16 {dimension_numbers = #tpu.dot_dimension_numbers<[1], [0], [0], [1], [0, 0, 1, 1], [], []>} : vector<256x64xf32>, vector<64x2xf32>, vector<256x2xf32> -> vector<256x2xf32>
    %20 = vector.shape_cast %19 : vector<256x2xf32> to vector<16x16x2xf32>
    %21 = vector.shape_cast %1 : vector<16x16xf32> to vector<16x16x1xf32>
    %22 = vector.broadcast %21 : vector<16x16x1xf32> to vector<16x16x2xf32>
    %23 = arith.addf %20, %22 : vector<16x16x2xf32>
    %cst_17 = arith.constant dense<0xFF800000> : vector<16x2xf32>
    %24 = vector.multi_reduction <maximumf>, %23, %cst_17 [1] : vector<16x16x2xf32> to vector<16x2xf32>
    %25 = vector.shape_cast %24 : vector<16x2xf32> to vector<16x1x2xf32>
    %26 = vector.broadcast %25 : vector<16x1x2xf32> to vector<16x16x2xf32>
    %27 = arith.subf %23, %26 : vector<16x16x2xf32>
    %28 = math.exp %27 : vector<16x16x2xf32>
    %cst_18 = arith.constant dense<0.000000e+00> : vector<16x2xf32>
    %29 = vector.multi_reduction <add>, %28, %cst_18 [1] : vector<16x16x2xf32> to vector<16x2xf32>
    %30 = tpu.reciprocal %29 {approx = true} : vector<16x2xf32> -> vector<16x2xf32>
    %31 = vector.shape_cast %30 : vector<16x2xf32> to vector<16x1x2xf32>
    %32 = vector.broadcast %31 : vector<16x1x2xf32> to vector<16x16x2xf32>
    %33 = arith.mulf %28, %32 : vector<16x16x2xf32>
    %cst_19 = arith.constant dense<0.000000e+00> : vector<16x16xf32>
    %34 = vector.multi_reduction <add>, %33, %cst_19 [2] : vector<16x16x2xf32> to vector<16x16xf32>
    %cst_20 = arith.constant 5.000000e-01 : f32
    %35 = vector.broadcast %cst_20 : f32 to vector<16x16xf32>
    %36 = arith.mulf %34, %35 : vector<16x16xf32>
    %37 = vector.shape_cast %33 : vector<16x16x2xf32> to vector<256x2xf32>
    %c0_21 = arith.constant 0 : index
    %c0_22 = arith.constant 0 : index
    %38 = vector.load %arg11[%c0_21, %c0_22] : memref<2x64xf32, #tpu.memory_space<vmem>>, vector<2x64xf32>
    %cst_23 = arith.constant dense<0.000000e+00> : vector<256x64xf32>
    %39 = tpu.matmul %37, %38, %cst_23 {dimension_numbers = #tpu.dot_dimension_numbers<[1], [0], [0], [1], [0, 0, 1, 1], [], []>} : vector<256x2xf32>, vector<2x64xf32>, vector<256x64xf32> -> vector<256x64xf32>
    %40 = vector.shape_cast %39 : vector<256x64xf32> to vector<16x16x64xf32>
    %41 = arith.mulf %40, %13 : vector<16x16x64xf32>
    %cst_24 = arith.constant dense<0.000000e+00> : vector<16x64xf32>
    %42 = vector.multi_reduction <add>, %41, %cst_24 [1] : vector<16x16x64xf32> to vector<16x64xf32>
    %c0_25 = arith.constant 0 : index
    %c0_26 = arith.constant 0 : index
    %43 = vector.load %arg8[%c0_25, %c0_26] : memref<64x32xf32, #tpu.memory_space<vmem>>, vector<64x32xf32>
    %cst_27 = arith.constant dense<0.000000e+00> : vector<16x32xf32>
    %44 = tpu.matmul %42, %43, %cst_27 {dimension_numbers = #tpu.dot_dimension_numbers<[1], [0], [0], [1], [0, 0, 1, 1], [], []>} : vector<16x64xf32>, vector<64x32xf32>, vector<16x32xf32> -> vector<16x32xf32>
    %c0_28 = arith.constant 0 : index
    %c0_29 = arith.constant 0 : index
    %45 = vector.load %arg9[%c0_28, %c0_29] : memref<1x32xf32, #tpu.memory_space<vmem>>, vector<1x32xf32>
    %46 = vector.broadcast %45 : vector<1x32xf32> to vector<16x32xf32>
    %47 = arith.addf %44, %46 : vector<16x32xf32>
    %48 = tpu.concatenate %47, %36 in 1 : vector<16x32xf32>, vector<16x16xf32> -> vector<16x48xf32>
    %c0_30 = arith.constant 0 : index
    %c0_31 = arith.constant 0 : index
    %49 = vector.load %arg12[%c0_30, %c0_31] : memref<16x48xf32, #tpu.memory_space<vmem>>, vector<16x48xf32>
    tpu.vector_store %arg12[%c0_30, %c0_31], %48 {strides = array<i32>} : memref<16x48xf32, #tpu.memory_space<vmem>>, vector<16x48xf32>,
    return
  }
  func.func @transform_0(%arg0: i32) -> (i32, i32) {
    %c0_i32 = arith.constant 0 : i32
    %c0_i32_0 = arith.constant 0 : i32
    return %arg0, %c0_i32 : i32, i32
  }
  func.func @transform_1(%arg0: i32) -> (i32, i32) {
    %c0_i32 = arith.constant 0 : i32
    %c0_i32_0 = arith.constant 0 : i32
    return %arg0, %c0_i32 : i32, i32
  }
  func.func @transform_2(%arg0: i32) -> (i32, i32) {
    %c0_i32 = arith.constant 0 : i32
    %c0_i32_0 = arith.constant 0 : i32
    return %arg0, %c0_i32 : i32, i32
  }
  func.func @transform_3(%arg0: i32) -> (i32, i32) {
    %c0_i32 = arith.constant 0 : i32
    %c0_i32_0 = arith.constant 0 : i32
    %c0_i32_1 = arith.constant 0 : i32
    return %c0_i32, %c0_i32_0 : i32, i32
  }
  func.func @transform_4(%arg0: i32) -> (i32, i32) {
    %c0_i32 = arith.constant 0 : i32
    %c0_i32_0 = arith.constant 0 : i32
    %c0_i32_1 = arith.constant 0 : i32
    return %c0_i32, %c0_i32_0 : i32, i32
  }
  func.func @transform_5(%arg0: i32) -> (i32, i32) {
    %c0_i32 = arith.constant 0 : i32
    %c0_i32_0 = arith.constant 0 : i32
    %c0_i32_1 = arith.constant 0 : i32
    return %c0_i32, %c0_i32_0 : i32, i32
  }
  func.func @transform_6(%arg0: i32) -> (i32, i32) {
    %c0_i32 = arith.constant 0 : i32
    %c0_i32_0 = arith.constant 0 : i32
    %c0_i32_1 = arith.constant 0 : i32
    return %c0_i32, %c0_i32_0 : i32, i32
  }
  func.func @transform_7(%arg0: i32) -> (i32, i32) {
    %c0_i32 = arith.constant 0 : i32
    %c0_i32_0 = arith.constant 0 : i32
    %c0_i32_1 = arith.constant 0 : i32
    return %c0_i32, %c0_i32_0 : i32, i32
  }
  func.func @transform_8(%arg0: i32) -> (i32, i32) {
    %c0_i32 = arith.constant 0 : i32
    %c0_i32_0 = arith.constant 0 : i32
    %c0_i32_1 = arith.constant 0 : i32
    return %c0_i32, %c0_i32_0 : i32, i32
  }
  func.func @transform_9(%arg0: i32) -> (i32, i32) {
    %c0_i32 = arith.constant 0 : i32
    %c0_i32_0 = arith.constant 0 : i32
    %c0_i32_1 = arith.constant 0 : i32
    return %c0_i32, %c0_i32_0 : i32, i32
  }
  func.func @transform_10(%arg0: i32) -> (i32, i32) {
    %c0_i32 = arith.constant 0 : i32
    %c0_i32_0 = arith.constant 0 : i32
    %c0_i32_1 = arith.constant 0 : i32
    return %c0_i32, %c0_i32_0 : i32, i32
  }
  func.func @transform_11(%arg0: i32) -> (i32, i32) {
    %c0_i32 = arith.constant 0 : i32
    %c0_i32_0 = arith.constant 0 : i32
    return %arg0, %c0_i32 : i32, i32
  }
}

</mosaic_0001>

<llo_original>
// kernel: temporal_attention_forward.1
$region0: #{temporal_attention_forward.1}
  #allocation0 [shape = 'u32[]', space=smem, size = 0x4, offset = 0x4, fixed_abs, tag = 'smem constant byte address 0x4 - core index']
  #allocation1 [shape = 'u32[144,128]{1,0:T(1,128)}', space=vmem, size = 0x12000, scoped, tag = 'internal scratch']
  %s0 = inlined_call_operand.vmem [shape: f32[64,32], index: 0, kind: input, shape index: {}]
  %s1 = inlined_call_operand.vmem [shape: bf16[1024,64], index: 1, kind: input, shape index: {}]
  %s2 = inlined_call_operand.vmem [shape: f32[64,16], index: 2, kind: input, shape index: {}]
  %s3 = inlined_call_operand.vmem [shape: f32[32,64], index: 3, kind: input, shape index: {}]
  %s4 = inlined_call_operand.vmem [shape: f32[1,64], index: 4, kind: input, shape index: {}]
  %s5 = inlined_call_operand.vmem [shape: bf16[64,64], index: 5, kind: input, shape index: {}]
  %s6 = inlined_call_operand.vmem [shape: f32[1,64], index: 6, kind: input, shape index: {}]
  %s7 = inlined_call_operand.vmem [shape: f32[64,32], index: 7, kind: input, shape index: {}]
  %s8 = inlined_call_operand.vmem [shape: f32[1,32], index: 8, kind: input, shape index: {}]
  %s9 = inlined_call_operand.vmem [shape: f32[64,2], index: 9, kind: input, shape index: {}]
  %s10 = inlined_call_operand.vmem [shape: f32[2,64], index: 10, kind: input, shape index: {}]
  %s11 = inlined_call_operand.vmem [shape: f32[64,48], index: 11, kind: output, shape index: {}]
  %s12 = sld [smem:[#allocation0]]
  $region77: #{temporal_attention_forward.1} parent=0
    _
  %s14 = ssub.s32 1, %s12
  %s15 = scalar_select 0, %s14, %s12
  loop: start=0, step=1, limit=6
  $region2: #{temporal_attention_forward.1} parent=0 // loop_pre_header
    _
  $region3: #{temporal_attention_forward.1} parent=0 // loop_header
    %s17 = sphi 0, %s21
    %p18 = scmp.ge.s32.totalorder %s17, 6
    %s27 = sphi 0, %s29
    %s30 = sphi 0, %s27
    %s31 = sphi 0, %s30
    %s47 = sphi 0, %s31
    %s53 = sphi 0, %s55
    %s56 = sphi 0, %s53
    %s57 = sphi 0, %s56
    %s73 = sphi 0, %s57
    %s79 = sphi 0, %s81
    %s82 = sphi 0, %s79
    %s83 = sphi 0, %s82
    %s99 = sphi 0, %s83
    %s103 = sphi 0, %s103
    %s105 = sphi 0, %s103
    %s106 = sphi 0, %s105
    %s120 = sphi 0, %s106
    %s124 = sphi 0, %s124
    %s126 = sphi 0, %s124
    %s127 = sphi 0, %s126
    %s141 = sphi 0, %s127
    %s145 = sphi 0, %s145
    %s147 = sphi 0, %s145
    %s148 = sphi 0, %s147
    %s162 = sphi 0, %s148
    %s166 = sphi 0, %s166
    %s168 = sphi 0, %s166
    %s169 = sphi 0, %s168
    %s183 = sphi 0, %s169
    %s187 = sphi 0, %s187
    %s189 = sphi 0, %s187
    %s190 = sphi 0, %s189
    %s204 = sphi 0, %s190
    %s208 = sphi 0, %s208
    %s210 = sphi 0, %s208
    %s211 = sphi 0, %s210
    %s225 = sphi 0, %s211
    %s229 = sphi 0, %s229
    %s231 = sphi 0, %s229
    %s232 = sphi 0, %s231
    %s246 = sphi 0, %s232
    %s250 = sphi 0, %s250
    %s252 = sphi 0, %s250
    %s253 = sphi 0, %s252
    %s267 = sphi 0, %s253
    %s273 = sphi 0, %s275
    %s276 = sphi 0, %s273
    %s277 = sphi 0, %s276
    %s293 = sphi 0, %s277
  $region4: #{temporal_attention_forward.1} parent=0 // loop_header_branch
    %20 = sbr.rel (%p18) target = $region8
  $region5: #{temporal_attention_forward.1} parent=0 // loop_body
    %s22 = ssub.s32 %s17, 1
    %s23 = ssub.s32 %s17, 2
    %s24 = sadd.s32 %s17, 1
    %s25 = ssub.s32 %s17, %s24
    %p26 = scmp.eq.s32.totalorder %s25, 0
    %s28 = sadd.s32 %s27, 1
    %s29 = scalar_select %p26, %s27, %s28
    %p32 = pneg %p26
    %p33 = scmp.eq.s32.totalorder %s17, 3
    %p34 = por %p32, %p33
    %p35 = scmp.ne.s32.totalorder %s27, %s30
    %p36 = scmp.eq.s32.totalorder %s17, 0
    %p37 = por %p35, %p36
    %p38 = scmp.ne.s32.totalorder %s27, %s30
    %p39 = scmp.eq.s32.totalorder %s22, 3
    %p40 = por %p38, %p39
    %p41 = scmp.ne.s32.totalorder %s30, %s31
    %p42 = scmp.eq.s32.totalorder %s22, 0
    %p43 = por %p41, %p42
    %p44 = scmp.ne.s32.totalorder %s30, %s31
    %p45 = scmp.eq.s32.totalorder %s23, 3
    %p46 = por %p44, %p45
    %p48 = scmp.ne.s32.totalorder %s31, %s47
    %p49 = scmp.eq.s32.totalorder %s23, 0
    %p50 = por %p48, %p49
    %s51 = ssub.s32 %s17, %s24
    %p52 = scmp.eq.s32.totalorder %s51, 0
    %s54 = sadd.s32 %s53, 1
    %s55 = scalar_select %p52, %s53, %s54
    %p58 = pneg %p52
    %p59 = scmp.eq.s32.totalorder %s17, 3
    %p60 = por %p58, %p59
    %p61 = scmp.ne.s32.totalorder %s53, %s56
    %p62 = scmp.eq.s32.totalorder %s17, 0
    %p63 = por %p61, %p62
    %p64 = scmp.ne.s32.totalorder %s53, %s56
    %p65 = scmp.eq.s32.totalorder %s22, 3
    %p66 = por %p64, %p65
    %p67 = scmp.ne.s32.totalorder %s56, %s57
    %p68 = scmp.eq.s32.totalorder %s22, 0
    %p69 = por %p67, %p68
    %p70 = scmp.ne.s32.totalorder %s56, %s57
    %p71 = scmp.eq.s32.totalorder %s23, 3
    %p72 = por %p70, %p71
    %p74 = scmp.ne.s32.totalorder %s57, %s73
    %p75 = scmp.eq.s32.totalorder %s23, 0
    %p76 = por %p74, %p75
    %s77 = ssub.s32 %s17, %s24
    %p78 = scmp.eq.s32.totalorder %s77, 0
    %s80 = sadd.s32 %s79, 1
    %s81 = scalar_select %p78, %s79, %s80
    %p84 = pneg %p78
    %p85 = scmp.eq.s32.totalorder %s17, 3
    %p86 = por %p84, %p85
    %p87 = scmp.ne.s32.totalorder %s79, %s82
    %p88 = scmp.eq.s32.totalorder %s17, 0
    %p89 = por %p87, %p88
    %p90 = scmp.ne.s32.totalorder %s79, %s82
    %p91 = scmp.eq.s32.totalorder %s22, 3
    %p92 = por %p90, %p91
    %p93 = scmp.ne.s32.totalorder %s82, %s83
    %p94 = scmp.eq.s32.totalorder %s22, 0
    %p95 = por %p93, %p94
    %p96 = scmp.ne.s32.totalorder %s82, %s83
    %p97 = scmp.eq.s32.totalorder %s23, 3
    %p98 = por %p96, %p97
    %p100 = scmp.ne.s32.totalorder %s83, %s99
    %p101 = scmp.eq.s32.totalorder %s23, 0
    %p102 = por %p100, %p101
    %s104 = sadd.s32 %s103, 1
    %p107 = scmp.eq.s32.totalorder %s17, 3
    %p108 = scmp.ne.s32.totalorder %s103, %s105
    %p109 = scmp.eq.s32.totalorder %s17, 0
    %p110 = por %p108, %p109
    %p111 = scmp.ne.s32.totalorder %s103, %s105
    %p112 = scmp.eq.s32.totalorder %s22, 3
    %p113 = por %p111, %p112
    %p114 = scmp.ne.s32.totalorder %s105, %s106
    %p115 = scmp.eq.s32.totalorder %s22, 0
    %p116 = por %p114, %p115
    %p117 = scmp.ne.s32.totalorder %s105, %s106
    %p118 = scmp.eq.s32.totalorder %s23, 3
    %p119 = por %p117, %p118
    %p121 = scmp.ne.s32.totalorder %s106, %s120
    %p122 = scmp.eq.s32.totalorder %s23, 0
    %p123 = por %p121, %p122
    %s125 = sadd.s32 %s124, 1
    %p128 = scmp.eq.s32.totalorder %s17, 3
    %p129 = scmp.ne.s32.totalorder %s124, %s126
    %p130 = scmp.eq.s32.totalorder %s17, 0
    %p131 = por %p129, %p130
    %p132 = scmp.ne.s32.totalorder %s124, %s126
    %p133 = scmp.eq.s32.totalorder %s22, 3
    %p134 = por %p132, %p133
    %p135 = scmp.ne.s32.totalorder %s126, %s127
    %p136 = scmp.eq.s32.totalorder %s22, 0
    %p137 = por %p135, %p136
    %p138 = scmp.ne.s32.totalorder %s126, %s127
    %p139 = scmp.eq.s32.totalorder %s23, 3
    %p140 = por %p138, %p139
    %p142 = scmp.ne.s32.totalorder %s127, %s141
    %p143 = scmp.eq.s32.totalorder %s23, 0
    %p144 = por %p142, %p143
    %s146 = sadd.s32 %s145, 1
    %p149 = scmp.eq.s32.totalorder %s17, 3
    %p150 = scmp.ne.s32.totalorder %s145, %s147
    %p151 = scmp.eq.s32.totalorder %s17, 0
    %p152 = por %p150, %p151
    %p153 = scmp.ne.s32.totalorder %s145, %s147
    %p154 = scmp.eq.s32.totalorder %s22, 3
    %p155 = por %p153, %p154
    %p156 = scmp.ne.s32.totalorder %s147, %s148
    %p157 = scmp.eq.s32.totalorder %s22, 0
    %p158 = por %p156, %p157
    %p159 = scmp.ne.s32.totalorder %s147, %s148
    %p160 = scmp.eq.s32.totalorder %s23, 3
    %p161 = por %p159, %p160
    %p163 = scmp.ne.s32.totalorder %s148, %s162
    %p164 = scmp.eq.s32.totalorder %s23, 0
    %p165 = por %p163, %p164
    %s167 = sadd.s32 %s166, 1
    %p170 = scmp.eq.s32.totalorder %s17, 3
    %p171 = scmp.ne.s32.totalorder %s166, %s168
    %p172 = scmp.eq.s32.totalorder %s17, 0
    %p173 = por %p171, %p172
    %p174 = scmp.ne.s32.totalorder %s166, %s168
    %p175 = scmp.eq.s32.totalorder %s22, 3
    %p176 = por %p174, %p175
    %p177 = scmp.ne.s32.totalorder %s168, %s169
    %p178 = scmp.eq.s32.totalorder %s22, 0
    %p179 = por %p177, %p178
    %p180 = scmp.ne.s32.totalorder %s168, %s169
    %p181 = scmp.eq.s32.totalorder %s23, 3
    %p182 = por %p180, %p181
    %p184 = scmp.ne.s32.totalorder %s169, %s183
    %p185 = scmp.eq.s32.totalorder %s23, 0
    %p186 = por %p184, %p185
    %s188 = sadd.s32 %s187, 1
    %p191 = scmp.eq.s32.totalorder %s17, 3
    %p192 = scmp.ne.s32.totalorder %s187, %s189
    %p193 = scmp.eq.s32.totalorder %s17, 0
    %p194 = por %p192, %p193
    %p195 = scmp.ne.s32.totalorder %s187, %s189
    %p196 = scmp.eq.s32.totalorder %s22, 3
    %p197 = por %p195, %p196
    %p198 = scmp.ne.s32.totalorder %s189, %s190
    %p199 = scmp.eq.s32.totalorder %s22, 0
    %p200 = por %p198, %p199
    %p201 = scmp.ne.s32.totalorder %s189, %s190
    %p202 = scmp.eq.s32.totalorder %s23, 3
    %p203 = por %p201, %p202
    %p205 = scmp.ne.s32.totalorder %s190, %s204
    %p206 = scmp.eq.s32.totalorder %s23, 0
    %p207 = por %p205, %p206
    %s209 = sadd.s32 %s208, 1
    %p212 = scmp.eq.s32.totalorder %s17, 3
    %p213 = scmp.ne.s32.totalorder %s208, %s210
    %p214 = scmp.eq.s32.totalorder %s17, 0
    %p215 = por %p213, %p214
    %p216 = scmp.ne.s32.totalorder %s208, %s210
    %p217 = scmp.eq.s32.totalorder %s22, 3
    %p218 = por %p216, %p217
    %p219 = scmp.ne.s32.totalorder %s210, %s211
    %p220 = scmp.eq.s32.totalorder %s22, 0
    %p221 = por %p219, %p220
    %p222 = scmp.ne.s32.totalorder %s210, %s211
    %p223 = scmp.eq.s32.totalorder %s23, 3
    %p224 = por %p222, %p223
    %p226 = scmp.ne.s32.totalorder %s211, %s225
    %p227 = scmp.eq.s32.totalorder %s23, 0
    %p228 = por %p226, %p227
    %s230 = sadd.s32 %s229, 1
    %p233 = scmp.eq.s32.totalorder %s17, 3
    %p234 = scmp.ne.s32.totalorder %s229, %s231
    %p235 = scmp.eq.s32.totalorder %s17, 0
    %p236 = por %p234, %p235
    %p237 = scmp.ne.s32.totalorder %s229, %s231
    %p238 = scmp.eq.s32.totalorder %s22, 3
    %p239 = por %p237, %p238
    %p240 = scmp.ne.s32.totalorder %s231, %s232
    %p241 = scmp.eq.s32.totalorder %s22, 0
    %p242 = por %p240, %p241
    %p243 = scmp.ne.s32.totalorder %s231, %s232
    %p244 = scmp.eq.s32.totalorder %s23, 3
    %p245 = por %p243, %p244
    %p247 = scmp.ne.s32.totalorder %s232, %s246
    %p248 = scmp.eq.s32.totalorder %s23, 0
    %p249 = por %p247, %p248
    %s251 = sadd.s32 %s250, 1
    %p254 = scmp.eq.s32.totalorder %s17, 3
    %p255 = scmp.ne.s32.totalorder %s250, %s252
    %p256 = scmp.eq.s32.totalorder %s17, 0
    %p257 = por %p255, %p256
    %p258 = scmp.ne.s32.totalorder %s250, %s252
    %p259 = scmp.eq.s32.totalorder %s22, 3
    %p260 = por %p258, %p259
    %p261 = scmp.ne.s32.totalorder %s252, %s253
    %p262 = scmp.eq.s32.totalorder %s22, 0
    %p263 = por %p261, %p262
    %p264 = scmp.ne.s32.totalorder %s252, %s253
    %p265 = scmp.eq.s32.totalorder %s23, 3
    %p266 = por %p264, %p265
    %p268 = scmp.ne.s32.totalorder %s253, %s267
    %p269 = scmp.eq.s32.totalorder %s23, 0
    %p270 = por %p268, %p269
    %s271 = ssub.s32 %s17, %s24
    %p272 = scmp.eq.s32.totalorder %s271, 0
    %s274 = sadd.s32 %s273, 1
    %s275 = scalar_select %p272, %s273, %s274
    %p278 = pneg %p272
    %p279 = scmp.eq.s32.totalorder %s17, 3
    %p280 = por %p278, %p279
    %p281 = scmp.ne.s32.totalorder %s273, %s276
    %p282 = scmp.eq.s32.totalorder %s17, 0
    %p283 = por %p281, %p282
    %p284 = scmp.ne.s32.totalorder %s273, %s276
    %p285 = scmp.eq.s32.totalorder %s22, 3
    %p286 = por %p284, %p285
    %p287 = scmp.ne.s32.totalorder %s276, %s277
    %p288 = scmp.eq.s32.totalorder %s22, 0
    %p289 = por %p287, %p288
    %p290 = scmp.ne.s32.totalorder %s276, %s277
    %p291 = scmp.eq.s32.totalorder %s23, 3
    %p292 = por %p290, %p291
    %p294 = scmp.ne.s32.totalorder %s277, %s293
    %p295 = scmp.eq.s32.totalorder %s23, 0
    %p296 = por %p294, %p295
    %p297 = scmp.le.s32.totalorder 1, %s17
    %p298 = scmp.lt.s32.totalorder %s17, 5
    %p299 = pnand %p297, %p298
    %p300 = pneg %p299
    // Predicated region
    $region9: #{temporal_attention_forward.1} parent=5 // pred_check
      _
    $region10: #{temporal_attention_forward.1} parent=5 // pred_check_branch
      %302 = sbr.rel (%p299) target = $region12
    $region11: #{temporal_attention_forward.1} parent=5 // pred_region
      %s303 = ssub.s32 %s17, 1
      // Predicated region
      $region13: #{temporal_attention_forward.1} parent=11 // pred_check
        %p304 = pneg %p116
      $region14: #{temporal_attention_forward.1} parent=11 // pred_check_branch
        %306 = sbr.rel (%p304) target = $region16
      $region15: #{temporal_attention_forward.1} parent=11 // pred_region
        _
      $region16: #{temporal_attention_forward.1} parent=11 // pred_fallthru
        _
      // Predicated region
      $region17: #{temporal_attention_forward.1} parent=11 // pred_check
        %p307 = pneg %p137
      $region18: #{temporal_attention_forward.1} parent=11 // pred_check_branch
        %309 = sbr.rel (%p307) target = $region20
      $region19: #{temporal_attention_forward.1} parent=11 // pred_region
        _
      $region20: #{temporal_attention_forward.1} parent=11 // pred_fallthru
        _
      // Predicated region
      $region21: #{temporal_attention_forward.1} parent=11 // pred_check
        %p310 = pneg %p158
      $region22: #{temporal_attention_forward.1} parent=11 // pred_check_branch
        %312 = sbr.rel (%p310) target = $region24
      $region23: #{temporal_attention_forward.1} parent=11 // pred_region
        _
      $region24: #{temporal_attention_forward.1} parent=11 // pred_fallthru
        _
      // Predicated region
      $region25: #{temporal_attention_forward.1} parent=11 // pred_check
        %p313 = pneg %p179
      $region26: #{temporal_attention_forward.1} parent=11 // pred_check_branch
        %315 = sbr.rel (%p313) target = $region28
      $region27: #{temporal_attention_forward.1} parent=11 // pred_region
        _
      $region28: #{temporal_attention_forward.1} parent=11 // pred_fallthru
        _
      // Predicated region
      $region29: #{temporal_attention_forward.1} parent=11 // pred_check
        %p316 = pneg %p200
      $region30: #{temporal_attention_forward.1} parent=11 // pred_check_branch
        %318 = sbr.rel (%p316) target = $region32
      $region31: #{temporal_attention_forward.1} parent=11 // pred_region
        _
      $region32: #{temporal_attention_forward.1} parent=11 // pred_fallthru
        _
      // Predicated region
      $region33: #{temporal_attention_forward.1} parent=11 // pred_check
        %p319 = pneg %p221
      $region34: #{temporal_attention_forward.1} parent=11 // pred_check_branch
        %321 = sbr.rel (%p319) target = $region36
      $region35: #{temporal_attention_forward.1} parent=11 // pred_region
        _
      $region36: #{temporal_attention_forward.1} parent=11 // pred_fallthru
        _
      // Predicated region
      $region37: #{temporal_attention_forward.1} parent=11 // pred_check
        %p322 = pneg %p242
      $region38: #{temporal_attention_forward.1} parent=11 // pred_check_branch
        %324 = sbr.rel (%p322) target = $region40
      $region39: #{temporal_attention_forward.1} parent=11 // pred_region
        _
      $region40: #{temporal_attention_forward.1} parent=11 // pred_fallthru
        _
      // Predicated region
      $region41: #{temporal_attention_forward.1} parent=11 // pred_check
        %p325 = pneg %p263
      $region42: #{temporal_attention_forward.1} parent=11 // pred_check_branch
        %327 = sbr.rel (%p325) target = $region44
      $region43: #{temporal_attention_forward.1} parent=11 // pred_region
        _
      $region44: #{temporal_attention_forward.1} parent=11 // pred_fallthru
        _
    $region12: #{temporal_attention_forward.1} parent=5 // pred_fallthru
      _
    %p328 = scmp.lt.s32.totalorder %s17, 4
    // Predicated region
    $region45: #{temporal_attention_forward.1} parent=5 // pred_check
      %p329 = pneg %p328
    $region46: #{temporal_attention_forward.1} parent=5 // pred_check_branch
      %331 = sbr.rel (%p329) target = $region48
    $region47: #{temporal_attention_forward.1} parent=5 // pred_region
      // Predicated region
      $region49: #{temporal_attention_forward.1} parent=47 // pred_check
        %p332 = pneg %p37
      $region50: #{temporal_attention_forward.1} parent=47 // pred_check_branch
        %334 = sbr.rel (%p332) target = $region52
      $region51: #{temporal_attention_forward.1} parent=47 // pred_region
        %s335 = smul.u32 2, %s17
        %p336 = scmp.lt.s32.totalorder %s335, 7
        %s337 = scalar_select %p336, %s335, 7
        %s338 = smul.addr %s337, 8
        %s339 = scalar_lea.vmem %s0, %s338
        %s340 = smul.u32 2, %s17
      $region52: #{temporal_attention_forward.1} parent=47 // pred_fallthru
        _
      // Predicated region
      $region53: #{temporal_attention_forward.1} parent=47 // pred_check
        %p341 = pneg %p63
      $region54: #{temporal_attention_forward.1} parent=47 // pred_check_branch
        %343 = sbr.rel (%p341) target = $region56
      $region55: #{temporal_attention_forward.1} parent=47 // pred_region
        %s344 = smul.u32 32, %s17
        %p345 = scmp.lt.s32.totalorder %s344, 127
        %s346 = scalar_select %p345, %s344, 127
        %s347 = smul.addr %s346, 4
        %s348 = scalar_lea.vmem %s1, %s347
        %s349 = smul.u32 32, %s17
      $region56: #{temporal_attention_forward.1} parent=47 // pred_fallthru
        _
      // Predicated region
      $region57: #{temporal_attention_forward.1} parent=47 // pred_check
        %p350 = pneg %p89
      $region58: #{temporal_attention_forward.1} parent=47 // pred_check_branch
        %352 = sbr.rel (%p350) target = $region60
      $region59: #{temporal_attention_forward.1} parent=47 // pred_region
        %s353 = smul.u32 2, %s17
        %p354 = scmp.lt.s32.totalorder %s353, 7
        %s355 = scalar_select %p354, %s353, 7
        %s356 = smul.addr %s355, 8
        %s357 = scalar_lea.vmem %s2, %s356
        %s358 = smul.u32 2, %s17
      $region60: #{temporal_attention_forward.1} parent=47 // pred_fallthru
        _
    $region48: #{temporal_attention_forward.1} parent=5 // pred_fallthru
      _
    %p359 = scmp.le.s32.totalorder 1, %s17
    %p360 = scmp.lt.s32.totalorder %s17, 5
    %p361 = pnand %p359, %p360
    %p362 = pneg %p361
    // Predicated region
    $region61: #{temporal_attention_forward.1} parent=5 // pred_check
      _
    $region62: #{temporal_attention_forward.1} parent=5 // pred_check_branch
      %364 = sbr.rel (%p361) target = $region64
    $region63: #{temporal_attention_forward.1} parent=5 // pred_region
      %s365 = ssub.s32 %s17, 1
      %s366 = smul.u32 2, %s22
      %p367 = scmp.lt.s32.totalorder %s366, 7
      %s368 = scalar_select %p367, %s366, 7
      %s369 = smul.addr %s368, 8
      %s370 = scalar_lea.vmem %s0, %s369
      %p371 = pneg %p43
      %p372 = pneg %p40
      %s373 = smul.u32 32, %s22
      %p374 = scmp.lt.s32.totalorder %s373, 127
      %s375 = scalar_select %p374, %s373, 127
      %s376 = smul.addr %s375, 4
      %s377 = scalar_lea.vmem %s1, %s376
      %p378 = pneg %p69
      %p379 = pneg %p66
      %s380 = smul.u32 2, %s22
      %p381 = scmp.lt.s32.totalorder %s380, 7
      %s382 = scalar_select %p381, %s380, 7
      %s383 = smul.addr %s382, 8
      %s384 = scalar_lea.vmem %s2, %s383
      %p385 = pneg %p95
      %p386 = pneg %p92
      %p387 = pneg %p116
      %p388 = pneg %p113
      %p389 = pneg %p137
      %p390 = pneg %p134
      %p391 = pneg %p158
      %p392 = pneg %p155
      %p393 = pneg %p179
      %p394 = pneg %p176
      %p395 = pneg %p200
      %p396 = pneg %p197
      %p397 = pneg %p221
      %p398 = pneg %p218
      %p399 = pneg %p242
      %p400 = pneg %p239
      %p401 = pneg %p263
      %p402 = pneg %p260
      %p403 = pneg %p289
      %p404 = pneg %p286
      %s405 = smul.u32 2, %s22
      %p406 = scmp.lt.s32.totalorder %s405, 7
      %s407 = scalar_select %p406, %s405, 7
      %s408 = smul.addr %s407, 8
      %s409 = scalar_lea.vmem %s11, %s408
      %s410 = smul.u32 2, %s22
      %p411 = scmp.lt.s32.totalorder %s410, 7
      %s412 = scalar_select %p411, %s410, 7
      %s413 = smul.addr %s412, 8
      %s414 = scalar_lea.vmem %s0, %s413
      %s415 = smul.u32 2, %s22
      %s416 = smul.u32 32, %s22
      %p417 = scmp.lt.s32.totalorder %s416, 127
      %s418 = scalar_select %p417, %s416, 127
      %s419 = smul.addr %s418, 4
      %s420 = scalar_lea.vmem %s1, %s419
      %s421 = smul.u32 32, %s22
      %s422 = smul.u32 2, %s22
      %p423 = scmp.lt.s32.totalorder %s422, 7
      %s424 = scalar_select %p423, %s422, 7
      %s425 = smul.addr %s424, 8
      %s426 = scalar_lea.vmem %s2, %s425
      %s427 = smul.u32 2, %s22
      %s428 = smul.u32 2, %s22
      %p429 = scmp.lt.s32.totalorder %s428, 7
      %s430 = scalar_select %p429, %s428, 7
      %s431 = smul.addr %s430, 8
      %s432 = scalar_lea.vmem %s11, %s431
      %s433 = smul.u32 2, %s22
      %v435 = vld [vmem:[%s420] sm:$0xf]
      %v436 = vld [vmem:[%s420 + $0x4] sm:$0xf]
      %v437 = vld [vmem:[%s420 + $0x8] sm:$0xf]
      %v438 = vld [vmem:[%s420 + $0xc] sm:$0xf]
      %v439 = vld [vmem:[%s420 + $0x10] sm:$0xf]
      %v440 = vld [vmem:[%s420 + $0x14] sm:$0xf]
      %v441 = vld [vmem:[%s420 + $0x18] sm:$0xf]
      %v442 = vld [vmem:[%s420 + $0x1c] sm:$0xf]
      %v443 = vld [vmem:[%s420 + $0x20] sm:$0xf]
      %v444 = vld [vmem:[%s420 + $0x24] sm:$0xf]
      %v445 = vld [vmem:[%s420 + $0x28] sm:$0xf]
      %v446 = vld [vmem:[%s420 + $0x2c] sm:$0xf]
      %v447 = vld [vmem:[%s420 + $0x30] sm:$0xf]
      %v448 = vld [vmem:[%s420 + $0x34] sm:$0xf]
      %v449 = vld [vmem:[%s420 + $0x38] sm:$0xf]
      %v450 = vld [vmem:[%s420 + $0x3c] sm:$0xf]
      %v451 = vld [vmem:[%s420 + $0x40] sm:$0xf]
      %v452 = vld [vmem:[%s420 + $0x44] sm:$0xf]
      %v453 = vld [vmem:[%s420 + $0x48] sm:$0xf]
      %v454 = vld [vmem:[%s420 + $0x4c] sm:$0xf]
      %v455 = vld [vmem:[%s420 + $0x50] sm:$0xf]
      %v456 = vld [vmem:[%s420 + $0x54] sm:$0xf]
      %v457 = vld [vmem:[%s420 + $0x58] sm:$0xf]
      %v458 = vld [vmem:[%s420 + $0x5c] sm:$0xf]
      %v459 = vld [vmem:[%s420 + $0x60] sm:$0xf]
      %v460 = vld [vmem:[%s420 + $0x64] sm:$0xf]
      %v461 = vld [vmem:[%s420 + $0x68] sm:$0xf]
      %v462 = vld [vmem:[%s420 + $0x6c] sm:$0xf]
      %v463 = vld [vmem:[%s420 + $0x70] sm:$0xf]
      %v464 = vld [vmem:[%s420 + $0x74] sm:$0xf]
      %v465 = vld [vmem:[%s420 + $0x78] sm:$0xf]
      %v466 = vld [vmem:[%s420 + $0x7c] sm:$0xf]
      %v467 = vld [vmem:[%s426] sm:$0xff]
      %v468 = vld [vmem:[%s426 + $0x8] sm:$0xff]
      %v469 = vld [vmem:[%s414] sm:$0xff]
      %v470 = vld [vmem:[%s414 + $0x8] sm:$0xff]
      %v471 = vld [vmem:[%s3] sm:$0xff]
      %v472 = vld [vmem:[%s3 + $0x8] sm:$0xff]
      %v473 = vld [vmem:[%s3 + $0x10] sm:$0xff]
      %v474 = vld [vmem:[%s3 + $0x18] sm:$0xff]
      %v475 = vld [vmem:[%s4] sm:$0x1]
      %v477 = vlaneseq
      %v478 = vshrl.u32 %v477, 7
      %v479 = vsub.s32 0, %v478
      %v480 = vrot.slane %v475, %v479
      %vm482 = vcmask 261120
      %v484 = vsel %vm482, %v469, 0
      %v487 = vsel %vm482, %v470, 0
      %489 = vmatprep.subr.mxu0 0.0
      %490 = vmatpush1.msra.mxu0 %v471
      %491 = vmatprep.subr.mxu0 0.0
      %492 = vmatpush1.msra.mxu0 %v472
      %493 = vmatprep.subr.mxu0 0.0
      %494 = vmatpush1.msra.mxu0 %v473
      %495 = vmatprep.subr.mxu0 0.0
      %496 = vmatpush1.msra.mxu0 %v474
      %497 = vmatprep.subr.mxu0 0.0
      %498 = vmatpush1.msra.mxu0 0.0
      %499 = vmatprep.subr.mxu0 0.0
      %500 = vmatpush1.msra.mxu0 0.0
      %501 = vmatprep.subr.mxu0 0.0
      %502 = vmatpush1.msra.mxu0 0.0
      %503 = vmatprep.subr.mxu0 0.0
      %504 = vmatpush1.msra.mxu0 0.0
      %505 = vmatprep.subr.mxu0 0.0
      %506 = vmatpush1.msra.mxu0 0.0
      %507 = vmatprep.subr.mxu0 0.0
      %508 = vmatpush1.msra.mxu0 0.0
      %509 = vmatprep.subr.mxu0 0.0
      %510 = vmatpush1.msra.mxu0 0.0
      %511 = vmatprep.subr.mxu0 0.0
      %512 = vmatpush1.msra.mxu0 0.0
      %513 = vmatprep.subr.mxu0 0.0
      %514 = vmatpush1.msra.mxu0 0.0
      %515 = vmatprep.subr.mxu0 0.0
      %516 = vmatpush1.msra.mxu0 0.0
      %517 = vmatprep.subr.mxu0 0.0
      %518 = vmatpush1.msra.mxu0 0.0
      %519 = vmatprep.subr.mxu0 0.0
      %520 = vmatpush1.msra.mxu0 0.0
      %521 = vmatprep.subr.mxu0 0.0
      %522 = vmatpush1.msra.mxu0 0.0
      %523 = vmatprep.subr.mxu0 0.0
      %524 = vmatpush1.msra.mxu0 0.0
      %525 = vmatprep.subr.mxu0 0.0
      %526 = vmatpush1.msra.mxu0 0.0
      %527 = vmatprep.subr.mxu0 0.0
      %528 = vmatpush1.msra.mxu0 0.0
      %529 = vmatprep.subr.mxu0 0.0
      %530 = vmatpush1.msra.mxu0 0.0
      %531 = vmatprep.subr.mxu0 0.0
      %532 = vmatpush1.msra.mxu0 0.0
      %533 = vmatprep.subr.mxu0 0.0
      %534 = vmatpush1.msra.mxu0 0.0
      %535 = vmatprep.subr.mxu0 0.0
      %536 = vmatpush1.msra.mxu0 0.0
      %537 = vmatprep.subr.mxu0 0.0
      %538 = vmatpush1.msra.mxu0 0.0
      %539 = vmatprep.subr.mxu0 0.0
      %540 = vmatpush1.msra.mxu0 0.0
      %541 = vmatprep.subr.mxu0 0.0
      %542 = vmatpush1.msra.mxu0 0.0
      %543 = vmatprep.subr.mxu0 0.0
      %544 = vmatpush1.msra.mxu0 0.0
      %545 = vmatprep.subr.mxu0 0.0
      %546 = vmatpush1.msra.mxu0 0.0
      %547 = vmatprep.subr.mxu0 0.0
      %548 = vmatpush1.msra.mxu0 0.0
      %549 = vmatprep.subr.mxu0 0.0
      %550 = vmatpush1.msra.mxu0 0.0
      %551 = vmatprep.subr.mxu0 0.0
      %552 = vmatpush1.msra.mxu0 0.0
      %553 = vmatprep.mubr.f32.mxu0 0.0
      %554 = vmatmul.mubr.f32.gmra.mrb[0].mxu0 %v484
      %v555 = vpop.f32.mrb[0].mxu0
      %v556 = vadd.f32 %v480, %v555
      %v557 = vpop.f32.mrb[0].mxu0
      %558 = vmatprep.mubr.f32.mxu0 0.0
      %559 = vmatmul.mubr.f32.gmra.mrb[0].mxu0 %v487
      %v560 = vpop.f32.mrb[0].mxu0
      %v561 = vadd.f32 %v480, %v560
      %v562 = vpop.f32.mrb[0].mxu0
      %563 = vdwg.mxu0
      %v564 = vld [vmem:[%s5] sm:$0xf]
      %v565 = vld [vmem:[%s5 + $0x4] sm:$0xf]
      %v566 = vld [vmem:[%s5 + $0x8] sm:$0xf]
      %v567 = vld [vmem:[%s5 + $0xc] sm:$0xf]
      %v568 = vld [vmem:[%s5 + $0x10] sm:$0xf]
      %v569 = vld [vmem:[%s5 + $0x14] sm:$0xf]
      %v570 = vld [vmem:[%s5 + $0x18] sm:$0xf]
      %v571 = vld [vmem:[%s5 + $0x1c] sm:$0xf]
      %v572 = vld [vmem:[%s6] sm:$0x1]
      %v574 = vlaneseq
      %v575 = vshrl.u32 %v574, 7
      %v576 = vsub.s32 0, %v575
      %v577 = vrot.slane %v572, %v576
      %v611 = vunpack.c.l.b16 %v435
      %v612 = vunpack.c.l.b16 %v436
      %v613 = vunpack.c.l.b16 %v437
      %v614 = vunpack.c.l.b16 %v438
      %v615 = vunpack.c.l.b16 %v439
      %v616 = vunpack.c.l.b16 %v440
      %v617 = vunpack.c.l.b16 %v441
      %v618 = vunpack.c.l.b16 %v442
      %v619 = vunpack.c.l.b16 %v443
      %v620 = vunpack.c.l.b16 %v444
      %v621 = vunpack.c.l.b16 %v445
      %v622 = vunpack.c.l.b16 %v446
      %v623 = vunpack.c.l.b16 %v447
      %v624 = vunpack.c.l.b16 %v448
      %v625 = vunpack.c.l.b16 %v449
      %v626 = vunpack.c.l.b16 %v450
      %v627 = vunpack.c.l.b16 %v451
      %v628 = vunpack.c.l.b16 %v452
      %v629 = vunpack.c.l.b16 %v453
      %v630 = vunpack.c.l.b16 %v454
      %v631 = vunpack.c.l.b16 %v455
      %v632 = vunpack.c.l.b16 %v456
      %v633 = vunpack.c.l.b16 %v457
      %v634 = vunpack.c.l.b16 %v458
      %v635 = vunpack.c.l.b16 %v459
      %v636 = vunpack.c.l.b16 %v460
      %v637 = vunpack.c.l.b16 %v461
      %v638 = vunpack.c.l.b16 %v462
      %v639 = vunpack.c.l.b16 %v463
      %v640 = vunpack.c.l.b16 %v464
      %v641 = vunpack.c.l.b16 %v465
      %v642 = vunpack.c.l.b16 %v466
      %v643 = vpack.c.b16 %v612, %v611
      %v644 = vpack.c.b16 %v614, %v613
      %v645 = vpack.c.b16 %v616, %v615
      %v646 = vpack.c.b16 %v618, %v617
      %v647 = vpack.c.b16 %v620, %v619
      %v648 = vpack.c.b16 %v622, %v621
      %v649 = vpack.c.b16 %v624, %v623
      %v650 = vpack.c.b16 %v626, %v625
      %v651 = vpack.c.b16 %v628, %v627
      %v652 = vpack.c.b16 %v630, %v629
      %v653 = vpack.c.b16 %v632, %v631
      %v654 = vpack.c.b16 %v634, %v633
      %v655 = vpack.c.b16 %v636, %v635
      %v656 = vpack.c.b16 %v638, %v637
      %v657 = vpack.c.b16 %v640, %v639
      %v658 = vpack.c.b16 %v642, %v641
      %v667 = vunpack.c.l.b16 %v564
      %v668 = vunpack.c.l.b16 %v565
      %v669 = vunpack.c.l.b16 %v566
      %v670 = vunpack.c.l.b16 %v567
      %v671 = vunpack.c.l.b16 %v568
      %v672 = vunpack.c.l.b16 %v569
      %v673 = vunpack.c.l.b16 %v570
      %v674 = vunpack.c.l.b16 %v571
      %v675 = vpack.c.b16 %v668, %v667
      %v676 = vpack.c.b16 %v670, %v669
      %v677 = vpack.c.b16 %v672, %v671
      %v678 = vpack.c.b16 %v674, %v673
      %vm683 = vcmask 523264
      %v685 = vsel %vm683, %v643, 0
      %v688 = vsel %vm683, %v644, 0
      %v691 = vsel %vm683, %v645, 0
      %v694 = vsel %vm683, %v646, 0
      %v697 = vsel %vm683, %v647, 0
      %v700 = vsel %vm683, %v648, 0
      %v703 = vsel %vm683, %v649, 0
      %v706 = vsel %vm683, %v650, 0
      %v709 = vsel %vm683, %v651, 0
      %v712 = vsel %vm683, %v652, 0
      %v715 = vsel %vm683, %v653, 0
      %v718 = vsel %vm683, %v654, 0
      %v721 = vsel %vm683, %v655, 0
      %v724 = vsel %vm683, %v656, 0
      %v727 = vsel %vm683, %v657, 0
      %v730 = vsel %vm683, %v658, 0
      %732 = vmatprep.subr.bf16.mxu0 0
      %733 = vmatpush1.bf16.msra.mxu0 %v675
      %734 = vmatprep.subr.bf16.mxu0 0
      %735 = vmatpush1.bf16.msra.mxu0 %v676
      %736 = vmatprep.subr.bf16.mxu0 0
      %737 = vmatpush1.bf16.msra.mxu0 %v677
      %738 = vmatprep.subr.bf16.mxu0 0
      %739 = vmatpush1.bf16.msra.mxu0 %v678
      %740 = vmatprep.subr.bf16.mxu0 0
      %741 = vmatpush1.bf16.msra.mxu0 0
      %742 = vmatprep.subr.bf16.mxu0 0
      %743 = vmatpush1.bf16.msra.mxu0 0
      %744 = vmatprep.subr.bf16.mxu0 0
      %745 = vmatpush1.bf16.msra.mxu0 0
      %746 = vmatprep.subr.bf16.mxu0 0
      %747 = vmatpush1.bf16.msra.mxu0 0
      %748 = vmatprep.subr.bf16.mxu0 0
      %749 = vmatpush1.bf16.msra.mxu0 0
      %750 = vmatprep.subr.bf16.mxu0 0
      %751 = vmatpush1.bf16.msra.mxu0 0
      %752 = vmatprep.subr.bf16.mxu0 0
      %753 = vmatpush1.bf16.msra.mxu0 0
      %754 = vmatprep.subr.bf16.mxu0 0
      %755 = vmatpush1.bf16.msra.mxu0 0
      %756 = vmatprep.subr.bf16.mxu0 0
      %757 = vmatpush1.bf16.msra.mxu0 0
      %758 = vmatprep.subr.bf16.mxu0 0
      %759 = vmatpush1.bf16.msra.mxu0 0
      %760 = vmatprep.subr.bf16.mxu0 0
      %761 = vmatpush1.bf16.msra.mxu0 0
      %762 = vmatprep.subr.bf16.mxu0 0
      %763 = vmatpush1.bf16.msra.mxu0 0
      %764 = vmatprep.mubr.bf16.mxu0 0
      %765 = vmatmul.mubr.bf16.gmra.mrb[0].mxu0 %v685
      %v766 = vpop.f32.mrb[0].mxu0
      %v767 = vadd.f32 %v577, %v766
      %v768 = vpop.f32.mrb[0].mxu0
      %v769 = vpop.f32.mrb[0].mxu0
      %v770 = vadd.f32 %v577, %v769
      %v771 = vpop.f32.mrb[0].mxu0
      %772 = vmatprep.mubr.bf16.mxu0 0
      %773 = vmatmul.mubr.bf16.gmra.mrb[0].mxu0 %v688
      %v774 = vpop.f32.mrb[0].mxu0
      %v775 = vadd.f32 %v577, %v774
      %v776 = vpop.f32.mrb[0].mxu0
      %v777 = vpop.f32.mrb[0].mxu0
      %v778 = vadd.f32 %v577, %v777
      %v779 = vpop.f32.mrb[0].mxu0
      %780 = vmatprep.mubr.bf16.mxu0 0
      %781 = vmatmul.mubr.bf16.gmra.mrb[0].mxu0 %v691
      %v782 = vpop.f32.mrb[0].mxu0
      %v783 = vadd.f32 %v577, %v782
      %v784 = vpop.f32.mrb[0].mxu0
      %v785 = vpop.f32.mrb[0].mxu0
      %v786 = vadd.f32 %v577, %v785
      %v787 = vpop.f32.mrb[0].mxu0
      %788 = vmatprep.mubr.bf16.mxu0 0
      %789 = vmatmul.mubr.bf16.gmra.mrb[0].mxu0 %v694
      %v790 = vpop.f32.mrb[0].mxu0
      %v791 = vadd.f32 %v577, %v790
      %v792 = vpop.f32.mrb[0].mxu0
      %v793 = vpop.f32.mrb[0].mxu0
      %v794 = vadd.f32 %v577, %v793
      %v795 = vpop.f32.mrb[0].mxu0
      %796 = vmatprep.mubr.bf16.mxu0 0
      %797 = vmatmul.mubr.bf16.gmra.mrb[0].mxu0 %v697
      %v798 = vpop.f32.mrb[0].mxu0
      %v799 = vadd.f32 %v577, %v798
      %v800 = vpop.f32.mrb[0].mxu0
      %v801 = vpop.f32.mrb[0].mxu0
      %v802 = vadd.f32 %v577, %v801
      %v803 = vpop.f32.mrb[0].mxu0
      %804 = vmatprep.mubr.bf16.mxu0 0
      %805 = vmatmul.mubr.bf16.gmra.mrb[0].mxu0 %v700
      %v806 = vpop.f32.mrb[0].mxu0
      %v807 = vadd.f32 %v577, %v806
      %v808 = vpop.f32.mrb[0].mxu0
      %v809 = vpop.f32.mrb[0].mxu0
      %v810 = vadd.f32 %v577, %v809
      %v811 = vpop.f32.mrb[0].mxu0
      %812 = vmatprep.mubr.bf16.mxu0 0
      %813 = vmatmul.mubr.bf16.gmra.mrb[0].mxu0 %v703
      %v814 = vpop.f32.mrb[0].mxu0
      %v815 = vadd.f32 %v577, %v814
      %v816 = vpop.f32.mrb[0].mxu0
      %v817 = vpop.f32.mrb[0].mxu0
      %v818 = vadd.f32 %v577, %v817
      %v819 = vpop.f32.mrb[0].mxu0
      %820 = vmatprep.mubr.bf16.mxu0 0
      %821 = vmatmul.mubr.bf16.gmra.mrb[0].mxu0 %v706
      %v822 = vpop.f32.mrb[0].mxu0
      %v823 = vadd.f32 %v577, %v822
      %v824 = vpop.f32.mrb[0].mxu0
      %v825 = vpop.f32.mrb[0].mxu0
      %v826 = vadd.f32 %v577, %v825
      %v827 = vpop.f32.mrb[0].mxu0
      %828 = vmatprep.mubr.bf16.mxu0 0
      %829 = vmatmul.mubr.bf16.gmra.mrb[0].mxu0 %v709
      %v830 = vpop.f32.mrb[0].mxu0
      %v831 = vadd.f32 %v577, %v830
      %v832 = vpop.f32.mrb[0].mxu0
      %v833 = vpop.f32.mrb[0].mxu0
      %v834 = vadd.f32 %v577, %v833
      %v835 = vpop.f32.mrb[0].mxu0
      %836 = vmatprep.mubr.bf16.mxu0 0
      %837 = vmatmul.mubr.bf16.gmra.mrb[0].mxu0 %v712
      %v838 = vpop.f32.mrb[0].mxu0
      %v839 = vadd.f32 %v577, %v838
      %v840 = vpop.f32.mrb[0].mxu0
      %v841 = vpop.f32.mrb[0].mxu0
      %v842 = vadd.f32 %v577, %v841
      %v843 = vpop.f32.mrb[0].mxu0
      %844 = vmatprep.mubr.bf16.mxu0 0
      %845 = vmatmul.mubr.bf16.gmra.mrb[0].mxu0 %v715
      %v846 = vpop.f32.mrb[0].mxu0
      %v847 = vadd.f32 %v577, %v846
      %v848 = vpop.f32.mrb[0].mxu0
      %v849 = vpop.f32.mrb[0].mxu0
      %v850 = vadd.f32 %v577, %v849
      %v851 = vpop.f32.mrb[0].mxu0
      %852 = vmatprep.mubr.bf16.mxu0 0
      %853 = vmatmul.mubr.bf16.gmra.mrb[0].mxu0 %v718
      %v854 = vpop.f32.mrb[0].mxu0
      %v855 = vadd.f32 %v577, %v854
      %v856 = vpop.f32.mrb[0].mxu0
      %v857 = vpop.f32.mrb[0].mxu0
      %v858 = vadd.f32 %v577, %v857
      %v859 = vpop.f32.mrb[0].mxu0
      %860 = vmatprep.mubr.bf16.mxu0 0
      %861 = vmatmul.mubr.bf16.gmra.mrb[0].mxu0 %v721
      %v862 = vpop.f32.mrb[0].mxu0
      %v863 = vadd.f32 %v577, %v862
      %v864 = vpop.f32.mrb[0].mxu0
      %v865 = vpop.f32.mrb[0].mxu0
      %v866 = vadd.f32 %v577, %v865
      %v867 = vpop.f32.mrb[0].mxu0
      %868 = vmatprep.mubr.bf16.mxu0 0
      %869 = vmatmul.mubr.bf16.gmra.mrb[0].mxu0 %v724
      %v870 = vpop.f32.mrb[0].mxu0
      %v871 = vadd.f32 %v577, %v870
      %v872 = vpop.f32.mrb[0].mxu0
      %v873 = vpop.f32.mrb[0].mxu0
      %v874 = vadd.f32 %v577, %v873
      %v875 = vpop.f32.mrb[0].mxu0
      %876 = vmatprep.mubr.bf16.mxu0 0
      %877 = vmatmul.mubr.bf16.gmra.mrb[0].mxu0 %v727
      %v878 = vpop.f32.mrb[0].mxu0
      %v879 = vadd.f32 %v577, %v878
      %v880 = vpop.f32.mrb[0].mxu0
      %v881 = vpop.f32.mrb[0].mxu0
      %v882 = vadd.f32 %v577, %v881
      %v883 = vpop.f32.mrb[0].mxu0
      %884 = vmatprep.mubr.bf16.mxu0 0
      %885 = vmatmul.mubr.bf16.gmra.mrb[0].mxu0 %v730
      %v886 = vpop.f32.mrb[0].mxu0
      %v887 = vadd.f32 %v577, %v886
      %v888 = vpop.f32.mrb[0].mxu0
      %v889 = vpop.f32.mrb[0].mxu0
      %v890 = vadd.f32 %v577, %v889
      %v891 = vpop.f32.mrb[0].mxu0
      %892 = vdwg.mxu0
      %v895 = vcombine.high %v556, %v556
      %v897 = vunpack.c.l.s4 1966171168
      %v898 = vunpack.c.0.s8 %v897
      %v899 = vlaneseq
      %v900 = vshrl.u32 %v899, 7
      %v901 = vsub.s32 %v898, %v900
      %v902 = vrot.slane %v556, %v901
      %v904 = vunpack.c.l.s4 1966171168
      %v905 = vunpack.c.0.s8 %v904
      %v906 = vlaneseq
      %v907 = vshrl.u32 %v906, 7
      %v908 = vsub.s32 %v905, %v907
      %v909 = vrot.slane %v895, %v908
      %v910 = vcombine.high %v902, %v902
      %v911 = vcombine.high %v909, %v909
      %v913 = vunpack.c.l.s4 1966171168
      %v914 = vunpack.c.0.s8 %v913
      %v915 = vlaneseq
      %v916 = vshrl.u32 %v915, 7
      %v917 = vsub.s32 %v914, %v916
      %v918 = vrot.slane %v902, %v917
      %v920 = vunpack.c.l.s4 1966171168
      %v921 = vunpack.c.0.s8 %v920
      %v922 = vlaneseq
      %v923 = vshrl.u32 %v922, 7
      %v924 = vsub.s32 %v921, %v923
      %v925 = vrot.slane %v909, %v924
      %v927 = vunpack.c.l.s4 1966171168
      %v928 = vunpack.c.0.s8 %v927
      %v929 = vlaneseq
      %v930 = vshrl.u32 %v929, 7
      %v931 = vsub.s32 %v928, %v930
      %v932 = vrot.slane %v910, %v931
      %v934 = vunpack.c.l.s4 1966171168
      %v935 = vunpack.c.0.s8 %v934
      %v936 = vlaneseq
      %v937 = vshrl.u32 %v936, 7
      %v938 = vsub.s32 %v935, %v937
      %v939 = vrot.slane %v911, %v938
      %v940 = vcombine.high %v918, %v918
      %v941 = vcombine.high %v925, %v925
      %v942 = vcombine.high %v932, %v932
      %v943 = vcombine.high %v939, %v939
      %v944 = vcombine.high %v561, %v561
      %v946 = vunpack.c.l.s4 1966171168
      %v947 = vunpack.c.0.s8 %v946
      %v948 = vlaneseq
      %v949 = vshrl.u32 %v948, 7
      %v950 = vsub.s32 %v947, %v949
      %v951 = vrot.slane %v561, %v950
      %v953 = vunpack.c.l.s4 1966171168
      %v954 = vunpack.c.0.s8 %v953
      %v955 = vlaneseq
      %v956 = vshrl.u32 %v955, 7
      %v957 = vsub.s32 %v954, %v956
      %v958 = vrot.slane %v944, %v957
      %v959 = vcombine.high %v951, %v951
      %v960 = vcombine.high %v958, %v958
      %v962 = vunpack.c.l.s4 1966171168
      %v963 = vunpack.c.0.s8 %v962
      %v964 = vlaneseq
      %v965 = vshrl.u32 %v964, 7
      %v966 = vsub.s32 %v963, %v965
      %v967 = vrot.slane %v951, %v966
      %v969 = vunpack.c.l.s4 1966171168
      %v970 = vunpack.c.0.s8 %v969
      %v971 = vlaneseq
      %v972 = vshrl.u32 %v971, 7
      %v973 = vsub.s32 %v970, %v972
      %v974 = vrot.slane %v958, %v973
      %v976 = vunpack.c.l.s4 1966171168
      %v977 = vunpack.c.0.s8 %v976
      %v978 = vlaneseq
      %v979 = vshrl.u32 %v978, 7
      %v980 = vsub.s32 %v977, %v979
      %v981 = vrot.slane %v959, %v980
      %v983 = vunpack.c.l.s4 1966171168
      %v984 = vunpack.c.0.s8 %v983
      %v985 = vlaneseq
      %v986 = vshrl.u32 %v985, 7
      %v987 = vsub.s32 %v984, %v986
      %v988 = vrot.slane %v960, %v987
      %v989 = vcombine.high %v967, %v967
      %v990 = vcombine.high %v974, %v974
      %v991 = vcombine.high %v981, %v981
      %v992 = vcombine.high %v988, %v988
      %v993 = vlaneseq
      %v994 = vshrl.u32 %v993, 7
      %v995 = vsub.s32 0, %v994
      %v996 = vrot.slane %v918, %v995
      %v997 = vlaneseq
      %v998 = vshrl.u32 %v997, 7
      %v999 = vsub.s32 0, %v998
      %v1000 = vrot.slane %v932, %v999
      %v1001 = vlaneseq
      %v1002 = vshrl.u32 %v1001, 7
      %v1003 = vsub.s32 0, %v1002
      %v1004 = vrot.slane %v940, %v1003
      %v1005 = vlaneseq
      %v1006 = vshrl.u32 %v1005, 7
      %v1007 = vsub.s32 0, %v1006
      %v1008 = vrot.slane %v942, %v1007
      %v1009 = vlaneseq
      %v1010 = vshrl.u32 %v1009, 7
      %v1011 = vsub.s32 0, %v1010
      %v1012 = vrot.slane %v925, %v1011
      %v1013 = vlaneseq
      %v1014 = vshrl.u32 %v1013, 7
      %v1015 = vsub.s32 0, %v1014
      %v1016 = vrot.slane %v939, %v1015
      %v1017 = vlaneseq
      %v1018 = vshrl.u32 %v1017, 7
      %v1019 = vsub.s32 0, %v1018
      %v1020 = vrot.slane %v941, %v1019
      %v1021 = vlaneseq
      %v1022 = vshrl.u32 %v1021, 7
      %v1023 = vsub.s32 0, %v1022
      %v1024 = vrot.slane %v943, %v1023
      %v1025 = vlaneseq
      %v1026 = vshrl.u32 %v1025, 7
      %v1027 = vsub.s32 0, %v1026
      %v1028 = vrot.slane %v967, %v1027
      %v1029 = vlaneseq
      %v1030 = vshrl.u32 %v1029, 7
      %v1031 = vsub.s32 0, %v1030
      %v1032 = vrot.slane %v981, %v1031
      %v1033 = vlaneseq
      %v1034 = vshrl.u32 %v1033, 7
      %v1035 = vsub.s32 0, %v1034
      %v1036 = vrot.slane %v989, %v1035
      %v1037 = vlaneseq
      %v1038 = vshrl.u32 %v1037, 7
      %v1039 = vsub.s32 0, %v1038
      %v1040 = vrot.slane %v991, %v1039
      %v1041 = vlaneseq
      %v1042 = vshrl.u32 %v1041, 7
      %v1043 = vsub.s32 0, %v1042
      %v1044 = vrot.slane %v974, %v1043
      %v1045 = vlaneseq
      %v1046 = vshrl.u32 %v1045, 7
      %v1047 = vsub.s32 0, %v1046
      %v1048 = vrot.slane %v988, %v1047
      %v1049 = vlaneseq
      %v1050 = vshrl.u32 %v1049, 7
      %v1051 = vsub.s32 0, %v1050
      %v1052 = vrot.slane %v990, %v1051
      %v1053 = vlaneseq
      %v1054 = vshrl.u32 %v1053, 7
      %v1055 = vsub.s32 0, %v1054
      %v1056 = vrot.slane %v992, %v1055
      %v1073 = vmul.f32 %v996, %v767
      %v1074 = vmul.f32 %v996, %v770
      %v1075 = vmul.f32 %v1000, %v775
      %v1076 = vmul.f32 %v1000, %v778
      %v1077 = vmul.f32 %v1004, %v783
      %v1078 = vmul.f32 %v1004, %v786
      %v1079 = vmul.f32 %v1008, %v791
      %v1080 = vmul.f32 %v1008, %v794
      %v1081 = vmul.f32 %v1012, %v799
      %v1082 = vmul.f32 %v1012, %v802
      %v1083 = vmul.f32 %v1016, %v807
      %v1084 = vmul.f32 %v1016, %v810
      %v1085 = vmul.f32 %v1020, %v815
      %v1086 = vmul.f32 %v1020, %v818
      %v1087 = vmul.f32 %v1024, %v823
      %v1088 = vmul.f32 %v1024, %v826
      %v1089 = vmul.f32 %v1028, %v831
      %v1090 = vmul.f32 %v1028, %v834
      %v1091 = vmul.f32 %v1032, %v839
      %v1092 = vmul.f32 %v1032, %v842
      %v1093 = vmul.f32 %v1036, %v847
      %v1094 = vmul.f32 %v1036, %v850
      %v1095 = vmul.f32 %v1040, %v855
      %v1096 = vmul.f32 %v1040, %v858
      %v1097 = vmul.f32 %v1044, %v863
      %v1098 = vmul.f32 %v1044, %v866
      %v1099 = vmul.f32 %v1048, %v871
      %v1100 = vmul.f32 %v1048, %v874
      %v1101 = vmul.f32 %v1052, %v879
      %v1102 = vmul.f32 %v1052, %v882
      %v1103 = vmul.f32 %v1056, %v887
      %v1104 = vmul.f32 %v1056, %v890
      %v1105 = vld [vmem:[%s9] sm:$0xff]
      %v1106 = vld [vmem:[%s9 + $0x8] sm:$0xff]
      %v1107 = vld [vmem:[%s9 + $0x10] sm:$0xff]
      %v1108 = vld [vmem:[%s9 + $0x18] sm:$0xff]
      %v1109 = vld [vmem:[%s9 + $0x20] sm:$0xff]
      %v1110 = vld [vmem:[%s9 + $0x28] sm:$0xff]
      %v1111 = vld [vmem:[%s9 + $0x30] sm:$0xff]
      %v1112 = vld [vmem:[%s9 + $0x38] sm:$0xff]
      %v1114 = vsel %vm683, %v1073, 0
      %v1117 = vsel %vm683, %v1074, 0
      %v1120 = vsel %vm683, %v1075, 0
      %v1123 = vsel %vm683, %v1076, 0
      %v1126 = vsel %vm683, %v1077, 0
      %v1129 = vsel %vm683, %v1078, 0
      %v1132 = vsel %vm683, %v1079, 0
      %v1135 = vsel %vm683, %v1080, 0
      %v1138 = vsel %vm683, %v1081, 0
      %v1141 = vsel %vm683, %v1082, 0
      %v1144 = vsel %vm683, %v1083, 0
      %v1147 = vsel %vm683, %v1084, 0
      %v1150 = vsel %vm683, %v1085, 0
      %v1153 = vsel %vm683, %v1086, 0
      %v1156 = vsel %vm683, %v1087, 0
      %v1159 = vsel %vm683, %v1088, 0
      %v1162 = vsel %vm683, %v1089, 0
      %v1165 = vsel %vm683, %v1090, 0
      %v1168 = vsel %vm683, %v1091, 0
      %v1171 = vsel %vm683, %v1092, 0
      %v1174 = vsel %vm683, %v1093, 0
      %v1177 = vsel %vm683, %v1094, 0
      %v1180 = vsel %vm683, %v1095, 0
      %v1183 = vsel %vm683, %v1096, 0
      %v1186 = vsel %vm683, %v1097, 0
      %v1189 = vsel %vm683, %v1098, 0
      %v1192 = vsel %vm683, %v1099, 0
      %v1195 = vsel %vm683, %v1100, 0
      %v1198 = vsel %vm683, %v1101, 0
      %v1201 = vsel %vm683, %v1102, 0
      %v1204 = vsel %vm683, %v1103, 0
      %v1207 = vsel %vm683, %v1104, 0
      %1209 = vmatprep.subr.mxu0 0.0
      %1210 = vmatpush1.msra.mxu0 %v1105
      %1211 = vmatprep.subr.mxu0 0.0
      %1212 = vmatpush1.msra.mxu0 %v1106
      %1213 = vmatprep.subr.mxu0 0.0
      %1214 = vmatpush1.msra.mxu0 %v1107
      %1215 = vmatprep.subr.mxu0 0.0
      %1216 = vmatpush1.msra.mxu0 %v1108
      %1217 = vmatprep.subr.mxu0 0.0
      %1218 = vmatpush1.msra.mxu0 %v1109
      %1219 = vmatprep.subr.mxu0 0.0
      %1220 = vmatpush1.msra.mxu0 %v1110
      %1221 = vmatprep.subr.mxu0 0.0
      %1222 = vmatpush1.msra.mxu0 %v1111
      %1223 = vmatprep.subr.mxu0 0.0
      %1224 = vmatpush1.msra.mxu0 %v1112
      %1225 = vmatprep.subr.mxu0 0.0
      %1226 = vmatpush1.msra.mxu0 0.0
      %1227 = vmatprep.subr.mxu0 0.0
      %1228 = vmatpush1.msra.mxu0 0.0
      %1229 = vmatprep.subr.mxu0 0.0
      %1230 = vmatpush1.msra.mxu0 0.0
      %1231 = vmatprep.subr.mxu0 0.0
      %1232 = vmatpush1.msra.mxu0 0.0
      %1233 = vmatprep.subr.mxu0 0.0
      %1234 = vmatpush1.msra.mxu0 0.0
      %1235 = vmatprep.subr.mxu0 0.0
      %1236 = vmatpush1.msra.mxu0 0.0
      %1237 = vmatprep.subr.mxu0 0.0
      %1238 = vmatpush1.msra.mxu0 0.0
      %1239 = vmatprep.subr.mxu0 0.0
      %1240 = vmatpush1.msra.mxu0 0.0
      %1241 = vmatprep.subr.mxu0 0.0
      %1242 = vmatpush1.msra.mxu0 0.0
      %1243 = vmatprep.subr.mxu0 0.0
      %1244 = vmatpush1.msra.mxu0 0.0
      %1245 = vmatprep.subr.mxu0 0.0
      %1246 = vmatpush1.msra.mxu0 0.0
      %1247 = vmatprep.subr.mxu0 0.0
      %1248 = vmatpush1.msra.mxu0 0.0
      %1249 = vmatprep.subr.mxu0 0.0
      %1250 = vmatpush1.msra.mxu0 0.0
      %1251 = vmatprep.subr.mxu0 0.0
      %1252 = vmatpush1.msra.mxu0 0.0
      %1253 = vmatprep.subr.mxu0 0.0
      %1254 = vmatpush1.msra.mxu0 0.0
      %1255 = vmatprep.subr.mxu0 0.0
      %1256 = vmatpush1.msra.mxu0 0.0
      %1257 = vmatprep.subr.mxu0 0.0
      %1258 = vmatpush1.msra.mxu0 0.0
      %1259 = vmatprep.subr.mxu0 0.0
      %1260 = vmatpush1.msra.mxu0 0.0
      %1261 = vmatprep.subr.mxu0 0.0
      %1262 = vmatpush1.msra.mxu0 0.0
      %1263 = vmatprep.subr.mxu0 0.0
      %1264 = vmatpush1.msra.mxu0 0.0
      %1265 = vmatprep.subr.mxu0 0.0
      %1266 = vmatpush1.msra.mxu0 0.0
      %1267 = vmatprep.subr.mxu0 0.0
      %1268 = vmatpush1.msra.mxu0 0.0
      %1269 = vmatprep.subr.mxu0 0.0
      %1270 = vmatpush1.msra.mxu0 0.0
      %1271 = vmatprep.subr.mxu0 0.0
      %1272 = vmatpush1.msra.mxu0 0.0
      %1273 = vmatprep.mubr.f32.mxu0 0.0
      %1274 = vmatmul.mubr.f32.gmra.mrb[0].mxu0 %v1114
      %v1275 = vpop.f32.mrb[0].mxu0
      %v1276 = vadd.f32 0.0, %v1275
      %v1277 = vpop.f32.mrb[0].mxu0
      %1278 = vmatprep.mubr.f32.mxu0 0.0
      %1279 = vmatmul.mubr.f32.gmra.mrb[0].mxu0 %v1117
      %v1280 = vpop.f32.mrb[0].mxu0
      %v1281 = vadd.f32 0.0, %v1280
      %v1282 = vpop.f32.mrb[0].mxu0
      %1283 = vmatprep.mubr.f32.mxu0 0.0
      %1284 = vmatmul.mubr.f32.gmra.mrb[0].mxu0 %v1120
      %v1285 = vpop.f32.mrb[0].mxu0
      %v1286 = vadd.f32 0.0, %v1285
      %v1287 = vpop.f32.mrb[0].mxu0
      %1288 = vmatprep.mubr.f32.mxu0 0.0
      %1289 = vmatmul.mubr.f32.gmra.mrb[0].mxu0 %v1123
      %v1290 = vpop.f32.mrb[0].mxu0
      %v1291 = vadd.f32 0.0, %v1290
      %v1292 = vpop.f32.mrb[0].mxu0
      %1293 = vmatprep.mubr.f32.mxu0 0.0
      %1294 = vmatmul.mubr.f32.gmra.mrb[0].mxu0 %v1126
      %v1295 = vpop.f32.mrb[0].mxu0
      %v1296 = vadd.f32 0.0, %v1295
      %v1297 = vpop.f32.mrb[0].mxu0
      %1298 = vmatprep.mubr.f32.mxu0 0.0
      %1299 = vmatmul.mubr.f32.gmra.mrb[0].mxu0 %v1129
      %v1300 = vpop.f32.mrb[0].mxu0
      %v1301 = vadd.f32 0.0, %v1300
      %v1302 = vpop.f32.mrb[0].mxu0
      %1303 = vmatprep.mubr.f32.mxu0 0.0
      %1304 = vmatmul.mubr.f32.gmra.mrb[0].mxu0 %v1132
      %v1305 = vpop.f32.mrb[0].mxu0
      %v1306 = vadd.f32 0.0, %v1305
      %v1307 = vpop.f32.mrb[0].mxu0
      %1308 = vmatprep.mubr.f32.mxu0 0.0
      %1309 = vmatmul.mubr.f32.gmra.mrb[0].mxu0 %v1135
      %v1310 = vpop.f32.mrb[0].mxu0
      %v1311 = vadd.f32 0.0, %v1310
      %v1312 = vpop.f32.mrb[0].mxu0
      %1313 = vmatprep.mubr.f32.mxu0 0.0
      %1314 = vmatmul.mubr.f32.gmra.mrb[0].mxu0 %v1138
      %v1315 = vpop.f32.mrb[0].mxu0
      %v1316 = vadd.f32 0.0, %v1315
      %v1317 = vpop.f32.mrb[0].mxu0
      %1318 = vmatprep.mubr.f32.mxu0 0.0
      %1319 = vmatmul.mubr.f32.gmra.mrb[0].mxu0 %v1141
      %v1320 = vpop.f32.mrb[0].mxu0
      %v1321 = vadd.f32 0.0, %v1320
      %v1322 = vpop.f32.mrb[0].mxu0
      %1323 = vmatprep.mubr.f32.mxu0 0.0
      %1324 = vmatmul.mubr.f32.gmra.mrb[0].mxu0 %v1144
      %v1325 = vpop.f32.mrb[0].mxu0
      %v1326 = vadd.f32 0.0, %v1325
      %v1327 = vpop.f32.mrb[0].mxu0
      %1328 = vmatprep.mubr.f32.mxu0 0.0
      %1329 = vmatmul.mubr.f32.gmra.mrb[0].mxu0 %v1147
      %v1330 = vpop.f32.mrb[0].mxu0
      %v1331 = vadd.f32 0.0, %v1330
      %v1332 = vpop.f32.mrb[0].mxu0
      %1333 = vmatprep.mubr.f32.mxu0 0.0
      %1334 = vmatmul.mubr.f32.gmra.mrb[0].mxu0 %v1150
      %v1335 = vpop.f32.mrb[0].mxu0
      %v1336 = vadd.f32 0.0, %v1335
      %v1337 = vpop.f32.mrb[0].mxu0
      %1338 = vmatprep.mubr.f32.mxu0 0.0
      %1339 = vmatmul.mubr.f32.gmra.mrb[0].mxu0 %v1153
      %v1340 = vpop.f32.mrb[0].mxu0
      %v1341 = vadd.f32 0.0, %v1340
      %v1342 = vpop.f32.mrb[0].mxu0
      %1343 = vmatprep.mubr.f32.mxu0 0.0
      %1344 = vmatmul.mubr.f32.gmra.mrb[0].mxu0 %v1156
      %v1345 = vpop.f32.mrb[0].mxu0
      %v1346 = vadd.f32 0.0, %v1345
      %v1347 = vpop.f32.mrb[0].mxu0
      %1348 = vmatprep.mubr.f32.mxu0 0.0
      %1349 = vmatmul.mubr.f32.gmra.mrb[0].mxu0 %v1159
      %v1350 = vpop.f32.mrb[0].mxu0
      %v1351 = vadd.f32 0.0, %v1350
      %v1352 = vpop.f32.mrb[0].mxu0
      %1353 = vmatprep.mubr.f32.mxu0 0.0
      %1354 = vmatmul.mubr.f32.gmra.mrb[0].mxu0 %v1162
      %v1355 = vpop.f32.mrb[0].mxu0
      %v1356 = vadd.f32 0.0, %v1355
      %v1357 = vpop.f32.mrb[0].mxu0
      %1358 = vmatprep.mubr.f32.mxu0 0.0
      %1359 = vmatmul.mubr.f32.gmra.mrb[0].mxu0 %v1165
      %v1360 = vpop.f32.mrb[0].mxu0
      %v1361 = vadd.f32 0.0, %v1360
      %v1362 = vpop.f32.mrb[0].mxu0
      %1363 = vmatprep.mubr.f32.mxu0 0.0
      %1364 = vmatmul.mubr.f32.gmra.mrb[0].mxu0 %v1168
      %v1365 = vpop.f32.mrb[0].mxu0
      %v1366 = vadd.f32 0.0, %v1365
      %v1367 = vpop.f32.mrb[0].mxu0
      %1368 = vmatprep.mubr.f32.mxu0 0.0
      %1369 = vmatmul.mubr.f32.gmra.mrb[0].mxu0 %v1171
      %v1370 = vpop.f32.mrb[0].mxu0
      %v1371 = vadd.f32 0.0, %v1370
      %v1372 = vpop.f32.mrb[0].mxu0
      %1373 = vmatprep.mubr.f32.mxu0 0.0
      %1374 = vmatmul.mubr.f32.gmra.mrb[0].mxu0 %v1174
      %v1375 = vpop.f32.mrb[0].mxu0
      %v1376 = vadd.f32 0.0, %v1375
      %v1377 = vpop.f32.mrb[0].mxu0
      %1378 = vmatprep.mubr.f32.mxu0 0.0
      %1379 = vmatmul.mubr.f32.gmra.mrb[0].mxu0 %v1177
      %v1380 = vpop.f32.mrb[0].mxu0
      %v1381 = vadd.f32 0.0, %v1380
      %v1382 = vpop.f32.mrb[0].mxu0
      %1383 = vmatprep.mubr.f32.mxu0 0.0
      %1384 = vmatmul.mubr.f32.gmra.mrb[0].mxu0 %v1180
      %v1385 = vpop.f32.mrb[0].mxu0
      %v1386 = vadd.f32 0.0, %v1385
      %v1387 = vpop.f32.mrb[0].mxu0
      %1388 = vmatprep.mubr.f32.mxu0 0.0
      %1389 = vmatmul.mubr.f32.gmra.mrb[0].mxu0 %v1183
      %v1390 = vpop.f32.mrb[0].mxu0
      %v1391 = vadd.f32 0.0, %v1390
      %v1392 = vpop.f32.mrb[0].mxu0
      %1393 = vmatprep.mubr.f32.mxu0 0.0
      %1394 = vmatmul.mubr.f32.gmra.mrb[0].mxu0 %v1186
      %v1395 = vpop.f32.mrb[0].mxu0
      %v1396 = vadd.f32 0.0, %v1395
      %v1397 = vpop.f32.mrb[0].mxu0
      %1398 = vmatprep.mubr.f32.mxu0 0.0
      %1399 = vmatmul.mubr.f32.gmra.mrb[0].mxu0 %v1189
      %v1400 = vpop.f32.mrb[0].mxu0
      %v1401 = vadd.f32 0.0, %v1400
      %v1402 = vpop.f32.mrb[0].mxu0
      %1403 = vmatprep.mubr.f32.mxu0 0.0
      %1404 = vmatmul.mubr.f32.gmra.mrb[0].mxu0 %v1192
      %v1405 = vpop.f32.mrb[0].mxu0
      %v1406 = vadd.f32 0.0, %v1405
      %v1407 = vpop.f32.mrb[0].mxu0
      %1408 = vmatprep.mubr.f32.mxu0 0.0
      %1409 = vmatmul.mubr.f32.gmra.mrb[0].mxu0 %v1195
      %v1410 = vpop.f32.mrb[0].mxu0
      %v1411 = vadd.f32 0.0, %v1410
      %v1412 = vpop.f32.mrb[0].mxu0
      %1413 = vmatprep.mubr.f32.mxu0 0.0
      %1414 = vmatmul.mubr.f32.gmra.mrb[0].mxu0 %v1198
      %v1415 = vpop.f32.mrb[0].mxu0
      %v1416 = vadd.f32 0.0, %v1415
      %v1417 = vpop.f32.mrb[0].mxu0
      %1418 = vmatprep.mubr.f32.mxu0 0.0
      %1419 = vmatmul.mubr.f32.gmra.mrb[0].mxu0 %v1201
      %v1420 = vpop.f32.mrb[0].mxu0
      %v1421 = vadd.f32 0.0, %v1420
      %v1422 = vpop.f32.mrb[0].mxu0
      %1423 = vmatprep.mubr.f32.mxu0 0.0
      %1424 = vmatmul.mubr.f32.gmra.mrb[0].mxu0 %v1204
      %v1425 = vpop.f32.mrb[0].mxu0
      %v1426 = vadd.f32 0.0, %v1425
      %v1427 = vpop.f32.mrb[0].mxu0
      %1428 = vmatprep.mubr.f32.mxu0 0.0
      %1429 = vmatmul.mubr.f32.gmra.mrb[0].mxu0 %v1207
      %v1430 = vpop.f32.mrb[0].mxu0
      %v1431 = vadd.f32 0.0, %v1430
      %v1432 = vpop.f32.mrb[0].mxu0
      %1433 = vdwg.mxu0
      %v1434 = vlaneseq
      %v1435 = vshrl.u32 %v1434, 7
      %v1436 = vsub.s32 0, %v1435
      %v1437 = vrot.slane %v467, %v1436
      %1439 = vbcast.lane.b32.xlu0 %v1437, 256
      %v1440 = vpop.permute.xlu0 %1439
      %s1442 = sor.u32 256, 8
      %1443 = vbcast.lane.b32.xlu0 %v1437, %s1442
      %v1444 = vpop.permute.xlu0 %1443
      %v1445 = vlaneseq
      %v1446 = vshrl.u32 %v1445, 7
      %v1447 = vsub.s32 1, %v1446
      %v1448 = vrot.slane %v467, %v1447
      %1450 = vbcast.lane.b32.xlu0 %v1448, 256
      %v1451 = vpop.permute.xlu0 %1450
      %s1453 = sor.u32 256, 8
      %1454 = vbcast.lane.b32.xlu0 %v1448, %s1453
      %v1455 = vpop.permute.xlu0 %1454
      %v1456 = vlaneseq
      %v1457 = vshrl.u32 %v1456, 7
      %v1458 = vsub.s32 2, %v1457
      %v1459 = vrot.slane %v467, %v1458
      %1461 = vbcast.lane.b32.xlu0 %v1459, 256
      %v1462 = vpop.permute.xlu0 %1461
      %s1464 = sor.u32 256, 8
      %1465 = vbcast.lane.b32.xlu0 %v1459, %s1464
      %v1466 = vpop.permute.xlu0 %1465
      %v1467 = vlaneseq
      %v1468 = vshrl.u32 %v1467, 7
      %v1469 = vsub.s32 3, %v1468
      %v1470 = vrot.slane %v467, %v1469
      %1472 = vbcast.lane.b32.xlu0 %v1470, 256
      %v1473 = vpop.permute.xlu0 %1472
      %s1475 = sor.u32 256, 8
      %1476 = vbcast.lane.b32.xlu0 %v1470, %s1475
      %v1477 = vpop.permute.xlu0 %1476
      %v1478 = vlaneseq
      %v1479 = vshrl.u32 %v1478, 7
      %v1480 = vsub.s32 4, %v1479
      %v1481 = vrot.slane %v467, %v1480
      %1483 = vbcast.lane.b32.xlu0 %v1481, 256
      %v1484 = vpop.permute.xlu0 %1483
      %s1486 = sor.u32 256, 8
      %1487 = vbcast.lane.b32.xlu0 %v1481, %s1486
      %v1488 = vpop.permute.xlu0 %1487
      %v1489 = vlaneseq
      %v1490 = vshrl.u32 %v1489, 7
      %v1491 = vsub.s32 5, %v1490
      %v1492 = vrot.slane %v467, %v1491
      %1494 = vbcast.lane.b32.xlu0 %v1492, 256
      %v1495 = vpop.permute.xlu0 %1494
      %s1497 = sor.u32 256, 8
      %1498 = vbcast.lane.b32.xlu0 %v1492, %s1497
      %v1499 = vpop.permute.xlu0 %1498
      %v1500 = vlaneseq
      %v1501 = vshrl.u32 %v1500, 7
      %v1502 = vsub.s32 6, %v1501
      %v1503 = vrot.slane %v467, %v1502
      %1505 = vbcast.lane.b32.xlu0 %v1503, 256
      %v1506 = vpop.permute.xlu0 %1505
      %s1508 = sor.u32 256, 8
      %1509 = vbcast.lane.b32.xlu0 %v1503, %s1508
      %v1510 = vpop.permute.xlu0 %1509
      %v1511 = vlaneseq
      %v1512 = vshrl.u32 %v1511, 7
      %v1513 = vsub.s32 7, %v1512
      %v1514 = vrot.slane %v467, %v1513
      %1516 = vbcast.lane.b32.xlu0 %v1514, 256
      %v1517 = vpop.permute.xlu0 %1516
      %s1519 = sor.u32 256, 8
      %1520 = vbcast.lane.b32.xlu0 %v1514, %s1519
      %v1521 = vpop.permute.xlu0 %1520
      %v1522 = vlaneseq
      %v1523 = vshrl.u32 %v1522, 7
      %v1524 = vsub.s32 0, %v1523
      %v1525 = vrot.slane %v468, %v1524
      %1527 = vbcast.lane.b32.xlu0 %v1525, 256
      %v1528 = vpop.permute.xlu0 %1527
      %s1530 = sor.u32 256, 8
      %1531 = vbcast.lane.b32.xlu0 %v1525, %s1530
      %v1532 = vpop.permute.xlu0 %1531
      %v1533 = vlaneseq
      %v1534 = vshrl.u32 %v1533, 7
      %v1535 = vsub.s32 1, %v1534
      %v1536 = vrot.slane %v468, %v1535
      %1538 = vbcast.lane.b32.xlu0 %v1536, 256
      %v1539 = vpop.permute.xlu0 %1538
      %s1541 = sor.u32 256, 8
      %1542 = vbcast.lane.b32.xlu0 %v1536, %s1541
      %v1543 = vpop.permute.xlu0 %1542
      %v1544 = vlaneseq
      %v1545 = vshrl.u32 %v1544, 7
      %v1546 = vsub.s32 2, %v1545
      %v1547 = vrot.slane %v468, %v1546
      %1549 = vbcast.lane.b32.xlu0 %v1547, 256
      %v1550 = vpop.permute.xlu0 %1549
      %s1552 = sor.u32 256, 8
      %1553 = vbcast.lane.b32.xlu0 %v1547, %s1552
      %v1554 = vpop.permute.xlu0 %1553
      %v1555 = vlaneseq
      %v1556 = vshrl.u32 %v1555, 7
      %v1557 = vsub.s32 3, %v1556
      %v1558 = vrot.slane %v468, %v1557
      %1560 = vbcast.lane.b32.xlu0 %v1558, 256
      %v1561 = vpop.permute.xlu0 %1560
      %s1563 = sor.u32 256, 8
      %1564 = vbcast.lane.b32.xlu0 %v1558, %s1563
      %v1565 = vpop.permute.xlu0 %1564
      %v1566 = vlaneseq
      %v1567 = vshrl.u32 %v1566, 7
      %v1568 = vsub.s32 4, %v1567
      %v1569 = vrot.slane %v468, %v1568
      %1571 = vbcast.lane.b32.xlu0 %v1569, 256
      %v1572 = vpop.permute.xlu0 %1571
      %s1574 = sor.u32 256, 8
      %1575 = vbcast.lane.b32.xlu0 %v1569, %s1574
      %v1576 = vpop.permute.xlu0 %1575
      %v1577 = vlaneseq
      %v1578 = vshrl.u32 %v1577, 7
      %v1579 = vsub.s32 5, %v1578
      %v1580 = vrot.slane %v468, %v1579
      %1582 = vbcast.lane.b32.xlu0 %v1580, 256
      %v1583 = vpop.permute.xlu0 %1582
      %s1585 = sor.u32 256, 8
      %1586 = vbcast.lane.b32.xlu0 %v1580, %s1585
      %v1587 = vpop.permute.xlu0 %1586
      %v1588 = vlaneseq
      %v1589 = vshrl.u32 %v1588, 7
      %v1590 = vsub.s32 6, %v1589
      %v1591 = vrot.slane %v468, %v1590
      %1593 = vbcast.lane.b32.xlu0 %v1591, 256
      %v1594 = vpop.permute.xlu0 %1593
      %s1596 = sor.u32 256, 8
      %1597 = vbcast.lane.b32.xlu0 %v1591, %s1596
      %v1598 = vpop.permute.xlu0 %1597
      %v1599 = vlaneseq
      %v1600 = vshrl.u32 %v1599, 7
      %v1601 = vsub.s32 7, %v1600
      %v1602 = vrot.slane %v468, %v1601
      %1604 = vbcast.lane.b32.xlu0 %v1602, 256
      %v1605 = vpop.permute.xlu0 %1604
      %s1607 = sor.u32 256, 8
      %1608 = vbcast.lane.b32.xlu0 %v1602, %s1607
      %v1609 = vpop.permute.xlu0 %1608
      %v1610 = vadd.f32 %v1276, %v1440
      %v1611 = vadd.f32 %v1281, %v1444
      %v1612 = vadd.f32 %v1286, %v1451
      %v1613 = vadd.f32 %v1291, %v1455
      %v1614 = vadd.f32 %v1296, %v1462
      %v1615 = vadd.f32 %v1301, %v1466
      %v1616 = vadd.f32 %v1306, %v1473
      %v1617 = vadd.f32 %v1311, %v1477
      %v1618 = vadd.f32 %v1316, %v1484
      %v1619 = vadd.f32 %v1321, %v1488
      %v1620 = vadd.f32 %v1326, %v1495
      %v1621 = vadd.f32 %v1331, %v1499
      %v1622 = vadd.f32 %v1336, %v1506
      %v1623 = vadd.f32 %v1341, %v1510
      %v1624 = vadd.f32 %v1346, %v1517
      %v1625 = vadd.f32 %v1351, %v1521
      %v1626 = vadd.f32 %v1356, %v1528
      %v1627 = vadd.f32 %v1361, %v1532
      %v1628 = vadd.f32 %v1366, %v1539
      %v1629 = vadd.f32 %v1371, %v1543
      %v1630 = vadd.f32 %v1376, %v1550
      %v1631 = vadd.f32 %v1381, %v1554
      %v1632 = vadd.f32 %v1386, %v1561
      %v1633 = vadd.f32 %v1391, %v1565
      %v1634 = vadd.f32 %v1396, %v1572
      %v1635 = vadd.f32 %v1401, %v1576
      %v1636 = vadd.f32 %v1406, %v1583
      %v1637 = vadd.f32 %v1411, %v1587
      %v1638 = vadd.f32 %v1416, %v1594
      %v1639 = vadd.f32 %v1421, %v1598
      %v1640 = vadd.f32 %v1426, %v1605
      %v1641 = vadd.f32 %v1431, %v1609
      %vm1642 = vcmask 15360
      %v1643 = vsel %vm1642, %v1610, -inf
      %v1644 = vsel %vm1642, %v1611, -inf
      %v1645 = vmax.f32 %v1643, %v1644
      %v1646 = vrot.slane %v1645, 4
      %v1647 = vmax.f32 %v1645, %v1646
      %v1648 = vrot.slane %v1647, 2
      %v1649 = vmax.f32 %v1647, %v1648
      %v1650 = vrot.slane %v1649, 1
      %v1651 = vmax.f32 %v1649, %v1650
      %v1652 = vsel %vm1642, %v1612, -inf
      %v1653 = vsel %vm1642, %v1613, -inf
      %v1654 = vmax.f32 %v1652, %v1653
      %v1655 = vrot.slane %v1654, 4
      %v1656 = vmax.f32 %v1654, %v1655
      %v1657 = vrot.slane %v1656, 2
      %v1658 = vmax.f32 %v1656, %v1657
      %v1659 = vrot.slane %v1658, 1
      %v1660 = vmax.f32 %v1658, %v1659
      %v1661 = vsel %vm1642, %v1614, -inf
      %v1662 = vsel %vm1642, %v1615, -inf
      %v1663 = vmax.f32 %v1661, %v1662
      %v1664 = vrot.slane %v1663, 4
      %v1665 = vmax.f32 %v1663, %v1664
      %v1666 = vrot.slane %v1665, 2
      %v1667 = vmax.f32 %v1665, %v1666
      %v1668 = vrot.slane %v1667, 1
      %v1669 = vmax.f32 %v1667, %v1668
      %v1670 = vsel %vm1642, %v1616, -inf
      %v1671 = vsel %vm1642, %v1617, -inf
      %v1672 = vmax.f32 %v1670, %v1671
      %v1673 = vrot.slane %v1672, 4
      %v1674 = vmax.f32 %v1672, %v1673
      %v1675 = vrot.slane %v1674, 2
      %v1676 = vmax.f32 %v1674, %v1675
      %v1677 = vrot.slane %v1676, 1
      %v1678 = vmax.f32 %v1676, %v1677
      %v1679 = vsel %vm1642, %v1618, -inf
      %v1680 = vsel %vm1642, %v1619, -inf
      %v1681 = vmax.f32 %v1679, %v1680
      %v1682 = vrot.slane %v1681, 4
      %v1683 = vmax.f32 %v1681, %v1682
      %v1684 = vrot.slane %v1683, 2
      %v1685 = vmax.f32 %v1683, %v1684
      %v1686 = vrot.slane %v1685, 1
      %v1687 = vmax.f32 %v1685, %v1686
      %v1688 = vsel %vm1642, %v1620, -inf
      %v1689 = vsel %vm1642, %v1621, -inf
      %v1690 = vmax.f32 %v1688, %v1689
      %v1691 = vrot.slane %v1690, 4
      %v1692 = vmax.f32 %v1690, %v1691
      %v1693 = vrot.slane %v1692, 2
      %v1694 = vmax.f32 %v1692, %v1693
      %v1695 = vrot.slane %v1694, 1
      %v1696 = vmax.f32 %v1694, %v1695
      %v1697 = vsel %vm1642, %v1622, -inf
      %v1698 = vsel %vm1642, %v1623, -inf
      %v1699 = vmax.f32 %v1697, %v1698
      %v1700 = vrot.slane %v1699, 4
      %v1701 = vmax.f32 %v1699, %v1700
      %v1702 = vrot.slane %v1701, 2
      %v1703 = vmax.f32 %v1701, %v1702
      %v1704 = vrot.slane %v1703, 1
      %v1705 = vmax.f32 %v1703, %v1704
      %v1706 = vsel %vm1642, %v1624, -inf
      %v1707 = vsel %vm1642, %v1625, -inf
      %v1708 = vmax.f32 %v1706, %v1707
      %v1709 = vrot.slane %v1708, 4
      %v1710 = vmax.f32 %v1708, %v1709
      %v1711 = vrot.slane %v1710, 2
      %v1712 = vmax.f32 %v1710, %v1711
      %v1713 = vrot.slane %v1712, 1
      %v1714 = vmax.f32 %v1712, %v1713
      %v1715 = vsel %vm1642, %v1626, -inf
      %v1716 = vsel %vm1642, %v1627, -inf
      %v1717 = vmax.f32 %v1715, %v1716
      %v1718 = vrot.slane %v1717, 4
      %v1719 = vmax.f32 %v1717, %v1718
      %v1720 = vrot.slane %v1719, 2
      %v1721 = vmax.f32 %v1719, %v1720
      %v1722 = vrot.slane %v1721, 1
      %v1723 = vmax.f32 %v1721, %v1722
      %v1724 = vsel %vm1642, %v1628, -inf
      %v1725 = vsel %vm1642, %v1629, -inf
      %v1726 = vmax.f32 %v1724, %v1725
      %v1727 = vrot.slane %v1726, 4
      %v1728 = vmax.f32 %v1726, %v1727
      %v1729 = vrot.slane %v1728, 2
      %v1730 = vmax.f32 %v1728, %v1729
      %v1731 = vrot.slane %v1730, 1
      %v1732 = vmax.f32 %v1730, %v1731
      %v1733 = vsel %vm1642, %v1630, -inf
      %v1734 = vsel %vm1642, %v1631, -inf
      %v1735 = vmax.f32 %v1733, %v1734
      %v1736 = vrot.slane %v1735, 4
      %v1737 = vmax.f32 %v1735, %v1736
      %v1738 = vrot.slane %v1737, 2
      %v1739 = vmax.f32 %v1737, %v1738
      %v1740 = vrot.slane %v1739, 1
      %v1741 = vmax.f32 %v1739, %v1740
      %v1742 = vsel %vm1642, %v1632, -inf
      %v1743 = vsel %vm1642, %v1633, -inf
      %v1744 = vmax.f32 %v1742, %v1743
      %v1745 = vrot.slane %v1744, 4
      %v1746 = vmax.f32 %v1744, %v1745
      %v1747 = vrot.slane %v1746, 2
      %v1748 = vmax.f32 %v1746, %v1747
      %v1749 = vrot.slane %v1748, 1
      %v1750 = vmax.f32 %v1748, %v1749
      %v1751 = vsel %vm1642, %v1634, -inf
      %v1752 = vsel %vm1642, %v1635, -inf
      %v1753 = vmax.f32 %v1751, %v1752
      %v1754 = vrot.slane %v1753, 4
      %v1755 = vmax.f32 %v1753, %v1754
      %v1756 = vrot.slane %v1755, 2
      %v1757 = vmax.f32 %v1755, %v1756
      %v1758 = vrot.slane %v1757, 1
      %v1759 = vmax.f32 %v1757, %v1758
      %v1760 = vsel %vm1642, %v1636, -inf
      %v1761 = vsel %vm1642, %v1637, -inf
      %v1762 = vmax.f32 %v1760, %v1761
      %v1763 = vrot.slane %v1762, 4
      %v1764 = vmax.f32 %v1762, %v1763
      %v1765 = vrot.slane %v1764, 2
      %v1766 = vmax.f32 %v1764, %v1765
      %v1767 = vrot.slane %v1766, 1
      %v1768 = vmax.f32 %v1766, %v1767
      %v1769 = vsel %vm1642, %v1638, -inf
      %v1770 = vsel %vm1642, %v1639, -inf
      %v1771 = vmax.f32 %v1769, %v1770
      %v1772 = vrot.slane %v1771, 4
      %v1773 = vmax.f32 %v1771, %v1772
      %v1774 = vrot.slane %v1773, 2
      %v1775 = vmax.f32 %v1773, %v1774
      %v1776 = vrot.slane %v1775, 1
      %v1777 = vmax.f32 %v1775, %v1776
      %v1778 = vsel %vm1642, %v1640, -inf
      %v1779 = vsel %vm1642, %v1641, -inf
      %v1780 = vmax.f32 %v1778, %v1779
      %v1781 = vrot.slane %v1780, 4
      %v1782 = vmax.f32 %v1780, %v1781
      %v1783 = vrot.slane %v1782, 2
      %v1784 = vmax.f32 %v1782, %v1783
      %v1785 = vrot.slane %v1784, 1
      %v1786 = vmax.f32 %v1784, %v1785
      %v1787 = vsub.f32 %v1610, %v1651
      %v1788 = vsub.f32 %v1611, %v1651
      %v1789 = vsub.f32 %v1612, %v1660
      %v1790 = vsub.f32 %v1613, %v1660
      %v1791 = vsub.f32 %v1614, %v1669
      %v1792 = vsub.f32 %v1615, %v1669
      %v1793 = vsub.f32 %v1616, %v1678
      %v1794 = vsub.f32 %v1617, %v1678
      %v1795 = vsub.f32 %v1618, %v1687
      %v1796 = vsub.f32 %v1619, %v1687
      %v1797 = vsub.f32 %v1620, %v1696
      %v1798 = vsub.f32 %v1621, %v1696
      %v1799 = vsub.f32 %v1622, %v1705
      %v1800 = vsub.f32 %v1623, %v1705
      %v1801 = vsub.f32 %v1624, %v1714
      %v1802 = vsub.f32 %v1625, %v1714
      %v1803 = vsub.f32 %v1626, %v1723
      %v1804 = vsub.f32 %v1627, %v1723
      %v1805 = vsub.f32 %v1628, %v1732
      %v1806 = vsub.f32 %v1629, %v1732
      %v1807 = vsub.f32 %v1630, %v1741
      %v1808 = vsub.f32 %v1631, %v1741
      %v1809 = vsub.f32 %v1632, %v1750
      %v1810 = vsub.f32 %v1633, %v1750
      %v1811 = vsub.f32 %v1634, %v1759
      %v1812 = vsub.f32 %v1635, %v1759
      %v1813 = vsub.f32 %v1636, %v1768
      %v1814 = vsub.f32 %v1637, %v1768
      %v1815 = vsub.f32 %v1638, %v1777
      %v1816 = vsub.f32 %v1639, %v1777
      %v1817 = vsub.f32 %v1640, %v1786
      %v1818 = vsub.f32 %v1641, %v1786
      %v1819 = vmul.f32 %v1787, 1.442695
      %v1820 = vpow.pop %v1819
      %v1821 = vmul.f32 %v1788, 1.442695
      %v1822 = vpow.pop %v1821
      %v1823 = vmul.f32 %v1789, 1.442695
      %v1824 = vpow.pop %v1823
      %v1825 = vmul.f32 %v1790, 1.442695
      %v1826 = vpow.pop %v1825
      %v1827 = vmul.f32 %v1791, 1.442695
      %v1828 = vpow.pop %v1827
      %v1829 = vmul.f32 %v1792, 1.442695
      %v1830 = vpow.pop %v1829
      %v1831 = vmul.f32 %v1793, 1.442695
      %v1832 = vpow.pop %v1831
      %v1833 = vmul.f32 %v1794, 1.442695
      %v1834 = vpow.pop %v1833
      %v1835 = vmul.f32 %v1795, 1.442695
      %v1836 = vpow.pop %v1835
      %v1837 = vmul.f32 %v1796, 1.442695
      %v1838 = vpow.pop %v1837
      %v1839 = vmul.f32 %v1797, 1.442695
      %v1840 = vpow.pop %v1839
      %v1841 = vmul.f32 %v1798, 1.442695
      %v1842 = vpow.pop %v1841
      %v1843 = vmul.f32 %v1799, 1.442695
      %v1844 = vpow.pop %v1843
      %v1845 = vmul.f32 %v1800, 1.442695
      %v1846 = vpow.pop %v1845
      %v1847 = vmul.f32 %v1801, 1.442695
      %v1848 = vpow.pop %v1847
      %v1849 = vmul.f32 %v1802, 1.442695
      %v1850 = vpow.pop %v1849
      %v1851 = vmul.f32 %v1803, 1.442695
      %v1852 = vpow.pop %v1851
      %v1853 = vmul.f32 %v1804, 1.442695
      %v1854 = vpow.pop %v1853
      %v1855 = vmul.f32 %v1805, 1.442695
      %v1856 = vpow.pop %v1855
      %v1857 = vmul.f32 %v1806, 1.442695
      %v1858 = vpow.pop %v1857
      %v1859 = vmul.f32 %v1807, 1.442695
      %v1860 = vpow.pop %v1859
      %v1861 = vmul.f32 %v1808, 1.442695
      %v1862 = vpow.pop %v1861
      %v1863 = vmul.f32 %v1809, 1.442695
      %v1864 = vpow.pop %v1863
      %v1865 = vmul.f32 %v1810, 1.442695
      %v1866 = vpow.pop %v1865
      %v1867 = vmul.f32 %v1811, 1.442695
      %v1868 = vpow.pop %v1867
      %v1869 = vmul.f32 %v1812, 1.442695
      %v1870 = vpow.pop %v1869
      %v1871 = vmul.f32 %v1813, 1.442695
      %v1872 = vpow.pop %v1871
      %v1873 = vmul.f32 %v1814, 1.442695
      %v1874 = vpow.pop %v1873
      %v1875 = vmul.f32 %v1815, 1.442695
      %v1876 = vpow.pop %v1875
      %v1877 = vmul.f32 %v1816, 1.442695
      %v1878 = vpow.pop %v1877
      %v1879 = vmul.f32 %v1817, 1.442695
      %v1880 = vpow.pop %v1879
      %v1881 = vmul.f32 %v1818, 1.442695
      %v1882 = vpow.pop %v1881
      %v1883 = vsel %vm1642, %v1820, 0.0
      %v1884 = vsel %vm1642, %v1822, 0.0
      %v1885 = vadd.f32 %v1883, %v1884
      %v1886 = vrot.slane %v1885, 4
      %v1887 = vadd.f32 %v1885, %v1886
      %v1888 = vrot.slane %v1887, 2
      %v1889 = vadd.f32 %v1887, %v1888
      %v1890 = vrot.slane %v1889, 1
      %v1891 = vadd.f32 %v1889, %v1890
      %v1892 = vsel %vm1642, %v1824, 0.0
      %v1893 = vsel %vm1642, %v1826, 0.0
      %v1894 = vadd.f32 %v1892, %v1893
      %v1895 = vrot.slane %v1894, 4
      %v1896 = vadd.f32 %v1894, %v1895
      %v1897 = vrot.slane %v1896, 2
      %v1898 = vadd.f32 %v1896, %v1897
      %v1899 = vrot.slane %v1898, 1
      %v1900 = vadd.f32 %v1898, %v1899
      %v1901 = vsel %vm1642, %v1828, 0.0
      %v1902 = vsel %vm1642, %v1830, 0.0
      %v1903 = vadd.f32 %v1901, %v1902
      %v1904 = vrot.slane %v1903, 4
      %v1905 = vadd.f32 %v1903, %v1904
      %v1906 = vrot.slane %v1905, 2
      %v1907 = vadd.f32 %v1905, %v1906
      %v1908 = vrot.slane %v1907, 1
      %v1909 = vadd.f32 %v1907, %v1908
      %v1910 = vsel %vm1642, %v1832, 0.0
      %v1911 = vsel %vm1642, %v1834, 0.0
      %v1912 = vadd.f32 %v1910, %v1911
      %v1913 = vrot.slane %v1912, 4
      %v1914 = vadd.f32 %v1912, %v1913
      %v1915 = vrot.slane %v1914, 2
      %v1916 = vadd.f32 %v1914, %v1915
      %v1917 = vrot.slane %v1916, 1
      %v1918 = vadd.f32 %v1916, %v1917
      %v1919 = vsel %vm1642, %v1836, 0.0
      %v1920 = vsel %vm1642, %v1838, 0.0
      %v1921 = vadd.f32 %v1919, %v1920
      %v1922 = vrot.slane %v1921, 4
      %v1923 = vadd.f32 %v1921, %v1922
      %v1924 = vrot.slane %v1923, 2
      %v1925 = vadd.f32 %v1923, %v1924
      %v1926 = vrot.slane %v1925, 1
      %v1927 = vadd.f32 %v1925, %v1926
      %v1928 = vsel %vm1642, %v1840, 0.0
      %v1929 = vsel %vm1642, %v1842, 0.0
      %v1930 = vadd.f32 %v1928, %v1929
      %v1931 = vrot.slane %v1930, 4
      %v1932 = vadd.f32 %v1930, %v1931
      %v1933 = vrot.slane %v1932, 2
      %v1934 = vadd.f32 %v1932, %v1933
      %v1935 = vrot.slane %v1934, 1
      %v1936 = vadd.f32 %v1934, %v1935
      %v1937 = vsel %vm1642, %v1844, 0.0
      %v1938 = vsel %vm1642, %v1846, 0.0
      %v1939 = vadd.f32 %v1937, %v1938
      %v1940 = vrot.slane %v1939, 4
      %v1941 = vadd.f32 %v1939, %v1940
      %v1942 = vrot.slane %v1941, 2
      %v1943 = vadd.f32 %v1941, %v1942
      %v1944 = vrot.slane %v1943, 1
      %v1945 = vadd.f32 %v1943, %v1944
      %v1946 = vsel %vm1642, %v1848, 0.0
      %v1947 = vsel %vm1642, %v1850, 0.0
      %v1948 = vadd.f32 %v1946, %v1947
      %v1949 = vrot.slane %v1948, 4
      %v1950 = vadd.f32 %v1948, %v1949
      %v1951 = vrot.slane %v1950, 2
      %v1952 = vadd.f32 %v1950, %v1951
      %v1953 = vrot.slane %v1952, 1
      %v1954 = vadd.f32 %v1952, %v1953
      %v1955 = vsel %vm1642, %v1852, 0.0
      %v1956 = vsel %vm1642, %v1854, 0.0
      %v1957 = vadd.f32 %v1955, %v1956
      %v1958 = vrot.slane %v1957, 4
      %v1959 = vadd.f32 %v1957, %v1958
      %v1960 = vrot.slane %v1959, 2
      %v1961 = vadd.f32 %v1959, %v1960
      %v1962 = vrot.slane %v1961, 1
      %v1963 = vadd.f32 %v1961, %v1962
      %v1964 = vsel %vm1642, %v1856, 0.0
      %v1965 = vsel %vm1642, %v1858, 0.0
      %v1966 = vadd.f32 %v1964, %v1965
      %v1967 = vrot.slane %v1966, 4
      %v1968 = vadd.f32 %v1966, %v1967
      %v1969 = vrot.slane %v1968, 2
      %v1970 = vadd.f32 %v1968, %v1969
      %v1971 = vrot.slane %v1970, 1
      %v1972 = vadd.f32 %v1970, %v1971
      %v1973 = vsel %vm1642, %v1860, 0.0
      %v1974 = vsel %vm1642, %v1862, 0.0
      %v1975 = vadd.f32 %v1973, %v1974
      %v1976 = vrot.slane %v1975, 4
      %v1977 = vadd.f32 %v1975, %v1976
      %v1978 = vrot.slane %v1977, 2
      %v1979 = vadd.f32 %v1977, %v1978
      %v1980 = vrot.slane %v1979, 1
      %v1981 = vadd.f32 %v1979, %v1980
      %v1982 = vsel %vm1642, %v1864, 0.0
      %v1983 = vsel %vm1642, %v1866, 0.0
      %v1984 = vadd.f32 %v1982, %v1983
      %v1985 = vrot.slane %v1984, 4
      %v1986 = vadd.f32 %v1984, %v1985
      %v1987 = vrot.slane %v1986, 2
      %v1988 = vadd.f32 %v1986, %v1987
      %v1989 = vrot.slane %v1988, 1
      %v1990 = vadd.f32 %v1988, %v1989
      %v1991 = vsel %vm1642, %v1868, 0.0
      %v1992 = vsel %vm1642, %v1870, 0.0
      %v1993 = vadd.f32 %v1991, %v1992
      %v1994 = vrot.slane %v1993, 4
      %v1995 = vadd.f32 %v1993, %v1994
      %v1996 = vrot.slane %v1995, 2
      %v1997 = vadd.f32 %v1995, %v1996
      %v1998 = vrot.slane %v1997, 1
      %v1999 = vadd.f32 %v1997, %v1998
      %v2000 = vsel %vm1642, %v1872, 0.0
      %v2001 = vsel %vm1642, %v1874, 0.0
      %v2002 = vadd.f32 %v2000, %v2001
      %v2003 = vrot.slane %v2002, 4
      %v2004 = vadd.f32 %v2002, %v2003
      %v2005 = vrot.slane %v2004, 2
      %v2006 = vadd.f32 %v2004, %v2005
      %v2007 = vrot.slane %v2006, 1
      %v2008 = vadd.f32 %v2006, %v2007
      %v2009 = vsel %vm1642, %v1876, 0.0
      %v2010 = vsel %vm1642, %v1878, 0.0
      %v2011 = vadd.f32 %v2009, %v2010
      %v2012 = vrot.slane %v2011, 4
      %v2013 = vadd.f32 %v2011, %v2012
      %v2014 = vrot.slane %v2013, 2
      %v2015 = vadd.f32 %v2013, %v2014
      %v2016 = vrot.slane %v2015, 1
      %v2017 = vadd.f32 %v2015, %v2016
      %v2018 = vsel %vm1642, %v1880, 0.0
      %v2019 = vsel %vm1642, %v1882, 0.0
      %v2020 = vadd.f32 %v2018, %v2019
      %v2021 = vrot.slane %v2020, 4
      %v2022 = vadd.f32 %v2020, %v2021
      %v2023 = vrot.slane %v2022, 2
      %v2024 = vadd.f32 %v2022, %v2023
      %v2025 = vrot.slane %v2024, 1
      %v2026 = vadd.f32 %v2024, %v2025
      %v2027 = vrcp.pop %v1891
      %v2028 = vrcp.pop %v1900
      %v2029 = vrcp.pop %v1909
      %v2030 = vrcp.pop %v1918
      %v2031 = vrcp.pop %v1927
      %v2032 = vrcp.pop %v1936
      %v2033 = vrcp.pop %v1945
      %v2034 = vrcp.pop %v1954
      %v2035 = vrcp.pop %v1963
      %v2036 = vrcp.pop %v1972
      %v2037 = vrcp.pop %v1981
      %v2038 = vrcp.pop %v1990
      %v2039 = vrcp.pop %v1999
      %v2040 = vrcp.pop %v2008
      %v2041 = vrcp.pop %v2017
      %v2042 = vrcp.pop %v2026
      %v2043 = vmul.f32 %v1820, %v2027
      %v2044 = vmul.f32 %v1822, %v2027
      %v2045 = vmul.f32 %v1824, %v2028
      %v2046 = vmul.f32 %v1826, %v2028
      %v2047 = vmul.f32 %v1828, %v2029
      %v2048 = vmul.f32 %v1830, %v2029
      %v2049 = vmul.f32 %v1832, %v2030
      %v2050 = vmul.f32 %v1834, %v2030
      %v2051 = vmul.f32 %v1836, %v2031
      %v2052 = vmul.f32 %v1838, %v2031
      %v2053 = vmul.f32 %v1840, %v2032
      %v2054 = vmul.f32 %v1842, %v2032
      %v2055 = vmul.f32 %v1844, %v2033
      %v2056 = vmul.f32 %v1846, %v2033
      %v2057 = vmul.f32 %v1848, %v2034
      %v2058 = vmul.f32 %v1850, %v2034
      %v2059 = vmul.f32 %v1852, %v2035
      %v2060 = vmul.f32 %v1854, %v2035
      %v2061 = vmul.f32 %v1856, %v2036
      %v2062 = vmul.f32 %v1858, %v2036
      %v2063 = vmul.f32 %v1860, %v2037
      %v2064 = vmul.f32 %v1862, %v2037
      %v2065 = vmul.f32 %v1864, %v2038
      %v2066 = vmul.f32 %v1866, %v2038
      %v2067 = vmul.f32 %v1868, %v2039
      %v2068 = vmul.f32 %v1870, %v2039
      %v2069 = vmul.f32 %v1872, %v2040
      %v2070 = vmul.f32 %v1874, %v2040
      %v2071 = vmul.f32 %v1876, %v2041
      %v2072 = vmul.f32 %v1878, %v2041
      %v2073 = vmul.f32 %v1880, %v2042
      %v2074 = vmul.f32 %v1882, %v2042
      %v2075 = vsel %vm1642, %v2043, 0.0
      %2076 = vadd.xlane.f32.xlu0 %v2075
      %v2077 = vpop.xlane.xlu0 %2076
      %v2078 = vsel %vm1642, %v2044, 0.0
      %2079 = vadd.xlane.f32.xlu0 %v2078
      %v2080 = vpop.xlane.xlu0 %2079
      %v2081 = vsel %vm1642, %v2045, 0.0
      %2082 = vadd.xlane.f32.xlu0 %v2081
      %v2083 = vpop.xlane.xlu0 %2082
      %v2084 = vsel %vm1642, %v2046, 0.0
      %2085 = vadd.xlane.f32.xlu0 %v2084
      %v2086 = vpop.xlane.xlu0 %2085
      %v2087 = vsel %vm1642, %v2047, 0.0
      %2088 = vadd.xlane.f32.xlu0 %v2087
      %v2089 = vpop.xlane.xlu0 %2088
      %v2090 = vsel %vm1642, %v2048, 0.0
      %2091 = vadd.xlane.f32.xlu0 %v2090
      %v2092 = vpop.xlane.xlu0 %2091
      %v2093 = vsel %vm1642, %v2049, 0.0
      %2094 = vadd.xlane.f32.xlu0 %v2093
      %v2095 = vpop.xlane.xlu0 %2094
      %v2096 = vsel %vm1642, %v2050, 0.0
      %2097 = vadd.xlane.f32.xlu0 %v2096
      %v2098 = vpop.xlane.xlu0 %2097
      %v2099 = vsel %vm1642, %v2051, 0.0
      %2100 = vadd.xlane.f32.xlu0 %v2099
      %v2101 = vpop.xlane.xlu0 %2100
      %v2102 = vsel %vm1642, %v2052, 0.0
      %2103 = vadd.xlane.f32.xlu0 %v2102
      %v2104 = vpop.xlane.xlu0 %2103
      %v2105 = vsel %vm1642, %v2053, 0.0
      %2106 = vadd.xlane.f32.xlu0 %v2105
      %v2107 = vpop.xlane.xlu0 %2106
      %v2108 = vsel %vm1642, %v2054, 0.0
      %2109 = vadd.xlane.f32.xlu0 %v2108
      %v2110 = vpop.xlane.xlu0 %2109
      %v2111 = vsel %vm1642, %v2055, 0.0
      %2112 = vadd.xlane.f32.xlu0 %v2111
      %v2113 = vpop.xlane.xlu0 %2112
      %v2114 = vsel %vm1642, %v2056, 0.0
      %2115 = vadd.xlane.f32.xlu0 %v2114
      %v2116 = vpop.xlane.xlu0 %2115
      %v2117 = vsel %vm1642, %v2057, 0.0
      %2118 = vadd.xlane.f32.xlu0 %v2117
      %v2119 = vpop.xlane.xlu0 %2118
      %v2120 = vsel %vm1642, %v2058, 0.0
      %2121 = vadd.xlane.f32.xlu0 %v2120
      %v2122 = vpop.xlane.xlu0 %2121
      %v2123 = vsel %vm1642, %v2059, 0.0
      %2124 = vadd.xlane.f32.xlu0 %v2123
      %v2125 = vpop.xlane.xlu0 %2124
      %v2126 = vsel %vm1642, %v2060, 0.0
      %2127 = vadd.xlane.f32.xlu0 %v2126
      %v2128 = vpop.xlane.xlu0 %2127
      %v2129 = vsel %vm1642, %v2061, 0.0
      %2130 = vadd.xlane.f32.xlu0 %v2129
      %v2131 = vpop.xlane.xlu0 %2130
      %v2132 = vsel %vm1642, %v2062, 0.0
      %2133 = vadd.xlane.f32.xlu0 %v2132
      %v2134 = vpop.xlane.xlu0 %2133
      %v2135 = vsel %vm1642, %v2063, 0.0
      %2136 = vadd.xlane.f32.xlu0 %v2135
      %v2137 = vpop.xlane.xlu0 %2136
      %v2138 = vsel %vm1642, %v2064, 0.0
      %2139 = vadd.xlane.f32.xlu0 %v2138
      %v2140 = vpop.xlane.xlu0 %2139
      %v2141 = vsel %vm1642, %v2065, 0.0
      %2142 = vadd.xlane.f32.xlu0 %v2141
      %v2143 = vpop.xlane.xlu0 %2142
      %v2144 = vsel %vm1642, %v2066, 0.0
      %2145 = vadd.xlane.f32.xlu0 %v2144
      %v2146 = vpop.xlane.xlu0 %2145
      %v2147 = vsel %vm1642, %v2067, 0.0
      %2148 = vadd.xlane.f32.xlu0 %v2147
      %v2149 = vpop.xlane.xlu0 %2148
      %v2150 = vsel %vm1642, %v2068, 0.0
      %2151 = vadd.xlane.f32.xlu0 %v2150
      %v2152 = vpop.xlane.xlu0 %2151
      %v2153 = vsel %vm1642, %v2069, 0.0
      %2154 = vadd.xlane.f32.xlu0 %v2153
      %v2155 = vpop.xlane.xlu0 %2154
      %v2156 = vsel %vm1642, %v2070, 0.0
      %2157 = vadd.xlane.f32.xlu0 %v2156
      %v2158 = vpop.xlane.xlu0 %2157
      %v2159 = vsel %vm1642, %v2071, 0.0
      %2160 = vadd.xlane.f32.xlu0 %v2159
      %v2161 = vpop.xlane.xlu0 %2160
      %v2162 = vsel %vm1642, %v2072, 0.0
      %2163 = vadd.xlane.f32.xlu0 %v2162
      %v2164 = vpop.xlane.xlu0 %2163
      %v2165 = vsel %vm1642, %v2073, 0.0
      %2166 = vadd.xlane.f32.xlu0 %v2165
      %v2167 = vpop.xlane.xlu0 %2166
      %v2168 = vsel %vm1642, %v2074, 0.0
      %2169 = vadd.xlane.f32.xlu0 %v2168
      %v2170 = vpop.xlane.xlu0 %2169
      %v2171 = vmul.f32 %v2077, 0.5
      %v2172 = vmul.f32 %v2080, 0.5
      %v2173 = vmul.f32 %v2083, 0.5
      %v2174 = vmul.f32 %v2086, 0.5
      %v2175 = vmul.f32 %v2089, 0.5
      %v2176 = vmul.f32 %v2092, 0.5
      %v2177 = vmul.f32 %v2095, 0.5
      %v2178 = vmul.f32 %v2098, 0.5
      %v2179 = vmul.f32 %v2101, 0.5
      %v2180 = vmul.f32 %v2104, 0.5
      %v2181 = vmul.f32 %v2107, 0.5
      %v2182 = vmul.f32 %v2110, 0.5
      %v2183 = vmul.f32 %v2113, 0.5
      %v2184 = vmul.f32 %v2116, 0.5
      %v2185 = vmul.f32 %v2119, 0.5
      %v2186 = vmul.f32 %v2122, 0.5
      %v2187 = vmul.f32 %v2125, 0.5
      %v2188 = vmul.f32 %v2128, 0.5
      %v2189 = vmul.f32 %v2131, 0.5
      %v2190 = vmul.f32 %v2134, 0.5
      %v2191 = vmul.f32 %v2137, 0.5
      %v2192 = vmul.f32 %v2140, 0.5
      %v2193 = vmul.f32 %v2143, 0.5
      %v2194 = vmul.f32 %v2146, 0.5
      %v2195 = vmul.f32 %v2149, 0.5
      %v2196 = vmul.f32 %v2152, 0.5
      %v2197 = vmul.f32 %v2155, 0.5
      %v2198 = vmul.f32 %v2158, 0.5
      %v2199 = vmul.f32 %v2161, 0.5
      %v2200 = vmul.f32 %v2164, 0.5
      %v2201 = vmul.f32 %v2167, 0.5
      %v2202 = vmul.f32 %v2170, 0.5
      %v2203 = vld [vmem:[%s10] sm:$0x3]
      %v2205 = vsel %vm1642, %v2043, 0
      %v2208 = vsel %vm1642, %v2044, 0
      %v2211 = vsel %vm1642, %v2045, 0
      %v2214 = vsel %vm1642, %v2046, 0
      %v2217 = vsel %vm1642, %v2047, 0
      %v2220 = vsel %vm1642, %v2048, 0
      %v2223 = vsel %vm1642, %v2049, 0
      %v2226 = vsel %vm1642, %v2050, 0
      %v2229 = vsel %vm1642, %v2051, 0
      %v2232 = vsel %vm1642, %v2052, 0
      %v2235 = vsel %vm1642, %v2053, 0
      %v2238 = vsel %vm1642, %v2054, 0
      %v2241 = vsel %vm1642, %v2055, 0
      %v2244 = vsel %vm1642, %v2056, 0
      %v2247 = vsel %vm1642, %v2057, 0
      %v2250 = vsel %vm1642, %v2058, 0
      %v2253 = vsel %vm1642, %v2059, 0
      %v2256 = vsel %vm1642, %v2060, 0
      %v2259 = vsel %vm1642, %v2061, 0
      %v2262 = vsel %vm1642, %v2062, 0
      %v2265 = vsel %vm1642, %v2063, 0
      %v2268 = vsel %vm1642, %v2064, 0
      %v2271 = vsel %vm1642, %v2065, 0
      %v2274 = vsel %vm1642, %v2066, 0
      %v2277 = vsel %vm1642, %v2067, 0
      %v2280 = vsel %vm1642, %v2068, 0
      %v2283 = vsel %vm1642, %v2069, 0
      %v2286 = vsel %vm1642, %v2070, 0
      %v2289 = vsel %vm1642, %v2071, 0
      %v2292 = vsel %vm1642, %v2072, 0
      %v2295 = vsel %vm1642, %v2073, 0
      %v2298 = vsel %vm1642, %v2074, 0
      %vm2300 = vcmask 1041408
      %v2302 = vsel %vm2300, %v2203, 0
      %2304 = vmatprep.subr.mxu0 0.0
      %2305 = vmatpush1.msra.mxu0 %v2302
      %2306 = vmatprep.subr.mxu0 0.0
      %2307 = vmatpush1.msra.mxu0 0.0
      %2308 = vmatprep.subr.mxu0 0.0
      %2309 = vmatpush1.msra.mxu0 0.0
      %2310 = vmatprep.subr.mxu0 0.0
      %2311 = vmatpush1.msra.mxu0 0.0
      %2312 = vmatprep.subr.mxu0 0.0
      %2313 = vmatpush1.msra.mxu0 0.0
      %2314 = vmatprep.subr.mxu0 0.0
      %2315 = vmatpush1.msra.mxu0 0.0
      %2316 = vmatprep.subr.mxu0 0.0
      %2317 = vmatpush1.msra.mxu0 0.0
      %2318 = vmatprep.subr.mxu0 0.0
      %2319 = vmatpush1.msra.mxu0 0.0
      %2320 = vmatprep.subr.mxu0 0.0
      %2321 = vmatpush1.msra.mxu0 0.0
      %2322 = vmatprep.subr.mxu0 0.0
      %2323 = vmatpush1.msra.mxu0 0.0
      %2324 = vmatprep.subr.mxu0 0.0
      %2325 = vmatpush1.msra.mxu0 0.0
      %2326 = vmatprep.subr.mxu0 0.0
      %2327 = vmatpush1.msra.mxu0 0.0
      %2328 = vmatprep.subr.mxu0 0.0
      %2329 = vmatpush1.msra.mxu0 0.0
      %2330 = vmatprep.subr.mxu0 0.0
      %2331 = vmatpush1.msra.mxu0 0.0
      %2332 = vmatprep.subr.mxu0 0.0
      %2333 = vmatpush1.msra.mxu0 0.0
      %2334 = vmatprep.subr.mxu0 0.0
      %2335 = vmatpush1.msra.mxu0 0.0
      %2336 = vmatprep.subr.mxu0 0.0
      %2337 = vmatpush1.msra.mxu0 0.0
      %2338 = vmatprep.subr.mxu0 0.0
      %2339 = vmatpush1.msra.mxu0 0.0
      %2340 = vmatprep.subr.mxu0 0.0
      %2341 = vmatpush1.msra.mxu0 0.0
      %2342 = vmatprep.subr.mxu0 0.0
      %2343 = vmatpush1.msra.mxu0 0.0
      %2344 = vmatprep.subr.mxu0 0.0
      %2345 = vmatpush1.msra.mxu0 0.0
      %2346 = vmatprep.subr.mxu0 0.0
      %2347 = vmatpush1.msra.mxu0 0.0
      %2348 = vmatprep.subr.mxu0 0.0
      %2349 = vmatpush1.msra.mxu0 0.0
      %2350 = vmatprep.subr.mxu0 0.0
      %2351 = vmatpush1.msra.mxu0 0.0
      %2352 = vmatprep.subr.mxu0 0.0
      %2353 = vmatpush1.msra.mxu0 0.0
      %2354 = vmatprep.subr.mxu0 0.0
      %2355 = vmatpush1.msra.mxu0 0.0
      %2356 = vmatprep.subr.mxu0 0.0
      %2357 = vmatpush1.msra.mxu0 0.0
      %2358 = vmatprep.subr.mxu0 0.0
      %2359 = vmatpush1.msra.mxu0 0.0
      %2360 = vmatprep.subr.mxu0 0.0
      %2361 = vmatpush1.msra.mxu0 0.0
      %2362 = vmatprep.subr.mxu0 0.0
      %2363 = vmatpush1.msra.mxu0 0.0
      %2364 = vmatprep.subr.mxu0 0.0
      %2365 = vmatpush1.msra.mxu0 0.0
      %2366 = vmatprep.subr.mxu0 0.0
      %2367 = vmatpush1.msra.mxu0 0.0
      %2368 = vmatprep.mubr.f32.mxu0 0.0
      %2369 = vmatmul.mubr.f32.gmra.mrb[0].mxu0 %v2205
      %v2370 = vpop.f32.mrb[0].mxu0
      %v2371 = vadd.f32 0.0, %v2370
      %v2372 = vpop.f32.mrb[0].mxu0
      %2373 = vmatprep.mubr.f32.mxu0 0.0
      %2374 = vmatmul.mubr.f32.gmra.mrb[0].mxu0 %v2208
      %v2375 = vpop.f32.mrb[0].mxu0
      %v2376 = vadd.f32 0.0, %v2375
      %v2377 = vpop.f32.mrb[0].mxu0
      %2378 = vmatprep.mubr.f32.mxu0 0.0
      %2379 = vmatmul.mubr.f32.gmra.mrb[0].mxu0 %v2211
      %v2380 = vpop.f32.mrb[0].mxu0
      %v2381 = vadd.f32 0.0, %v2380
      %v2382 = vpop.f32.mrb[0].mxu0
      %2383 = vmatprep.mubr.f32.mxu0 0.0
      %2384 = vmatmul.mubr.f32.gmra.mrb[0].mxu0 %v2214
      %v2385 = vpop.f32.mrb[0].mxu0
      %v2386 = vadd.f32 0.0, %v2385
      %v2387 = vpop.f32.mrb[0].mxu0
      %2388 = vmatprep.mubr.f32.mxu0 0.0
      %2389 = vmatmul.mubr.f32.gmra.mrb[0].mxu0 %v2217
      %v2390 = vpop.f32.mrb[0].mxu0
      %v2391 = vadd.f32 0.0, %v2390
      %v2392 = vpop.f32.mrb[0].mxu0
      %2393 = vmatprep.mubr.f32.mxu0 0.0
      %2394 = vmatmul.mubr.f32.gmra.mrb[0].mxu0 %v2220
      %v2395 = vpop.f32.mrb[0].mxu0
      %v2396 = vadd.f32 0.0, %v2395
      %v2397 = vpop.f32.mrb[0].mxu0
      %2398 = vmatprep.mubr.f32.mxu0 0.0
      %2399 = vmatmul.mubr.f32.gmra.mrb[0].mxu0 %v2223
      %v2400 = vpop.f32.mrb[0].mxu0
      %v2401 = vadd.f32 0.0, %v2400
      %v2402 = vpop.f32.mrb[0].mxu0
      %2403 = vmatprep.mubr.f32.mxu0 0.0
      %2404 = vmatmul.mubr.f32.gmra.mrb[0].mxu0 %v2226
      %v2405 = vpop.f32.mrb[0].mxu0
      %v2406 = vadd.f32 0.0, %v2405
      %v2407 = vpop.f32.mrb[0].mxu0
      %2408 = vmatprep.mubr.f32.mxu0 0.0
      %2409 = vmatmul.mubr.f32.gmra.mrb[0].mxu0 %v2229
      %v2410 = vpop.f32.mrb[0].mxu0
      %v2411 = vadd.f32 0.0, %v2410
      %v2412 = vpop.f32.mrb[0].mxu0
      %2413 = vmatprep.mubr.f32.mxu0 0.0
      %2414 = vmatmul.mubr.f32.gmra.mrb[0].mxu0 %v2232
      %v2415 = vpop.f32.mrb[0].mxu0
      %v2416 = vadd.f32 0.0, %v2415
      %v2417 = vpop.f32.mrb[0].mxu0
      %2418 = vmatprep.mubr.f32.mxu0 0.0
      %2419 = vmatmul.mubr.f32.gmra.mrb[0].mxu0 %v2235
      %v2420 = vpop.f32.mrb[0].mxu0
      %v2421 = vadd.f32 0.0, %v2420
      %v2422 = vpop.f32.mrb[0].mxu0
      %2423 = vmatprep.mubr.f32.mxu0 0.0
      %2424 = vmatmul.mubr.f32.gmra.mrb[0].mxu0 %v2238
      %v2425 = vpop.f32.mrb[0].mxu0
      %v2426 = vadd.f32 0.0, %v2425
      %v2427 = vpop.f32.mrb[0].mxu0
      %2428 = vmatprep.mubr.f32.mxu0 0.0
      %2429 = vmatmul.mubr.f32.gmra.mrb[0].mxu0 %v2241
      %v2430 = vpop.f32.mrb[0].mxu0
      %v2431 = vadd.f32 0.0, %v2430
      %v2432 = vpop.f32.mrb[0].mxu0
      %2433 = vmatprep.mubr.f32.mxu0 0.0
      %2434 = vmatmul.mubr.f32.gmra.mrb[0].mxu0 %v2244
      %v2435 = vpop.f32.mrb[0].mxu0
      %v2436 = vadd.f32 0.0, %v2435
      %v2437 = vpop.f32.mrb[0].mxu0
      %2438 = vmatprep.mubr.f32.mxu0 0.0
      %2439 = vmatmul.mubr.f32.gmra.mrb[0].mxu0 %v2247
      %v2440 = vpop.f32.mrb[0].mxu0
      %v2441 = vadd.f32 0.0, %v2440
      %v2442 = vpop.f32.mrb[0].mxu0
      %2443 = vmatprep.mubr.f32.mxu0 0.0
      %2444 = vmatmul.mubr.f32.gmra.mrb[0].mxu0 %v2250
      %v2445 = vpop.f32.mrb[0].mxu0
      %v2446 = vadd.f32 0.0, %v2445
      %v2447 = vpop.f32.mrb[0].mxu0
      %2448 = vmatprep.mubr.f32.mxu0 0.0
      %2449 = vmatmul.mubr.f32.gmra.mrb[0].mxu0 %v2253
      %v2450 = vpop.f32.mrb[0].mxu0
      %v2451 = vadd.f32 0.0, %v2450
      %v2452 = vpop.f32.mrb[0].mxu0
      %2453 = vmatprep.mubr.f32.mxu0 0.0
      %2454 = vmatmul.mubr.f32.gmra.mrb[0].mxu0 %v2256
      %v2455 = vpop.f32.mrb[0].mxu0
      %v2456 = vadd.f32 0.0, %v2455
      %v2457 = vpop.f32.mrb[0].mxu0
      %2458 = vmatprep.mubr.f32.mxu0 0.0
      %2459 = vmatmul.mubr.f32.gmra.mrb[0].mxu0 %v2259
      %v2460 = vpop.f32.mrb[0].mxu0
      %v2461 = vadd.f32 0.0, %v2460
      %v2462 = vpop.f32.mrb[0].mxu0
      %2463 = vmatprep.mubr.f32.mxu0 0.0
      %2464 = vmatmul.mubr.f32.gmra.mrb[0].mxu0 %v2262
      %v2465 = vpop.f32.mrb[0].mxu0
      %v2466 = vadd.f32 0.0, %v2465
      %v2467 = vpop.f32.mrb[0].mxu0
      %2468 = vmatprep.mubr.f32.mxu0 0.0
      %2469 = vmatmul.mubr.f32.gmra.mrb[0].mxu0 %v2265
      %v2470 = vpop.f32.mrb[0].mxu0
      %v2471 = vadd.f32 0.0, %v2470
      %v2472 = vpop.f32.mrb[0].mxu0
      %2473 = vmatprep.mubr.f32.mxu0 0.0
      %2474 = vmatmul.mubr.f32.gmra.mrb[0].mxu0 %v2268
      %v2475 = vpop.f32.mrb[0].mxu0
      %v2476 = vadd.f32 0.0, %v2475
      %v2477 = vpop.f32.mrb[0].mxu0
      %2478 = vmatprep.mubr.f32.mxu0 0.0
      %2479 = vmatmul.mubr.f32.gmra.mrb[0].mxu0 %v2271
      %v2480 = vpop.f32.mrb[0].mxu0
      %v2481 = vadd.f32 0.0, %v2480
      %v2482 = vpop.f32.mrb[0].mxu0
      %2483 = vmatprep.mubr.f32.mxu0 0.0
      %2484 = vmatmul.mubr.f32.gmra.mrb[0].mxu0 %v2274
      %v2485 = vpop.f32.mrb[0].mxu0
      %v2486 = vadd.f32 0.0, %v2485
      %v2487 = vpop.f32.mrb[0].mxu0
      %2488 = vmatprep.mubr.f32.mxu0 0.0
      %2489 = vmatmul.mubr.f32.gmra.mrb[0].mxu0 %v2277
      %v2490 = vpop.f32.mrb[0].mxu0
      %v2491 = vadd.f32 0.0, %v2490
      %v2492 = vpop.f32.mrb[0].mxu0
      %2493 = vmatprep.mubr.f32.mxu0 0.0
      %2494 = vmatmul.mubr.f32.gmra.mrb[0].mxu0 %v2280
      %v2495 = vpop.f32.mrb[0].mxu0
      %v2496 = vadd.f32 0.0, %v2495
      %v2497 = vpop.f32.mrb[0].mxu0
      %2498 = vmatprep.mubr.f32.mxu0 0.0
      %2499 = vmatmul.mubr.f32.gmra.mrb[0].mxu0 %v2283
      %v2500 = vpop.f32.mrb[0].mxu0
      %v2501 = vadd.f32 0.0, %v2500
      %v2502 = vpop.f32.mrb[0].mxu0
      %2503 = vmatprep.mubr.f32.mxu0 0.0
      %2504 = vmatmul.mubr.f32.gmra.mrb[0].mxu0 %v2286
      %v2505 = vpop.f32.mrb[0].mxu0
      %v2506 = vadd.f32 0.0, %v2505
      %v2507 = vpop.f32.mrb[0].mxu0
      %2508 = vmatprep.mubr.f32.mxu0 0.0
      %2509 = vmatmul.mubr.f32.gmra.mrb[0].mxu0 %v2289
      %v2510 = vpop.f32.mrb[0].mxu0
      %v2511 = vadd.f32 0.0, %v2510
      %v2512 = vpop.f32.mrb[0].mxu0
      %2513 = vmatprep.mubr.f32.mxu0 0.0
      %2514 = vmatmul.mubr.f32.gmra.mrb[0].mxu0 %v2292
      %v2515 = vpop.f32.mrb[0].mxu0
      %v2516 = vadd.f32 0.0, %v2515
      %v2517 = vpop.f32.mrb[0].mxu0
      %2518 = vmatprep.mubr.f32.mxu0 0.0
      %2519 = vmatmul.mubr.f32.gmra.mrb[0].mxu0 %v2295
      %v2520 = vpop.f32.mrb[0].mxu0
      %v2521 = vadd.f32 0.0, %v2520
      %v2522 = vpop.f32.mrb[0].mxu0
      %2523 = vmatprep.mubr.f32.mxu0 0.0
      %2524 = vmatmul.mubr.f32.gmra.mrb[0].mxu0 %v2298
      %v2525 = vpop.f32.mrb[0].mxu0
      %v2526 = vadd.f32 0.0, %v2525
      %v2527 = vpop.f32.mrb[0].mxu0
      %2528 = vdwg.mxu0
      %v2529 = vmul.f32 %v2371, %v767
      %v2530 = vmul.f32 %v2376, %v770
      %v2531 = vmul.f32 %v2381, %v775
      %v2532 = vmul.f32 %v2386, %v778
      %v2533 = vmul.f32 %v2391, %v783
      %v2534 = vmul.f32 %v2396, %v786
      %v2535 = vmul.f32 %v2401, %v791
      %v2536 = vmul.f32 %v2406, %v794
      %v2537 = vmul.f32 %v2411, %v799
      %v2538 = vmul.f32 %v2416, %v802
      %v2539 = vmul.f32 %v2421, %v807
      %v2540 = vmul.f32 %v2426, %v810
      %v2541 = vmul.f32 %v2431, %v815
      %v2542 = vmul.f32 %v2436, %v818
      %v2543 = vmul.f32 %v2441, %v823
      %v2544 = vmul.f32 %v2446, %v826
      %v2545 = vmul.f32 %v2451, %v831
      %v2546 = vmul.f32 %v2456, %v834
      %v2547 = vmul.f32 %v2461, %v839
      %v2548 = vmul.f32 %v2466, %v842
      %v2549 = vmul.f32 %v2471, %v847
      %v2550 = vmul.f32 %v2476, %v850
      %v2551 = vmul.f32 %v2481, %v855
      %v2552 = vmul.f32 %v2486, %v858
      %v2553 = vmul.f32 %v2491, %v863
      %v2554 = vmul.f32 %v2496, %v866
      %v2555 = vmul.f32 %v2501, %v871
      %v2556 = vmul.f32 %v2506, %v874
      %v2557 = vmul.f32 %v2511, %v879
      %v2558 = vmul.f32 %v2516, %v882
      %v2559 = vmul.f32 %v2521, %v887
      %v2560 = vmul.f32 %v2526, %v890
      %v2561 = vsel %vm683, %v2529, 0.0
      %v2562 = vsel %vm683, %v2530, 0.0
      %v2563 = vadd.f32 %v2561, %v2562
      %v2564 = vrot.slane %v2563, 4
      %v2565 = vadd.f32 %v2563, %v2564
      %v2566 = vrot.slane %v2565, 2
      %v2567 = vadd.f32 %v2565, %v2566
      %v2568 = vrot.slane %v2567, 1
      %v2569 = vadd.f32 %v2567, %v2568
      %v2570 = vsel %vm683, %v2531, 0.0
      %v2571 = vsel %vm683, %v2532, 0.0
      %v2572 = vadd.f32 %v2570, %v2571
      %v2573 = vrot.slane %v2572, 4
      %v2574 = vadd.f32 %v2572, %v2573
      %v2575 = vrot.slane %v2574, 2
      %v2576 = vadd.f32 %v2574, %v2575
      %v2577 = vrot.slane %v2576, 1
      %v2578 = vadd.f32 %v2576, %v2577
      %v2579 = vsel %vm683, %v2533, 0.0
      %v2580 = vsel %vm683, %v2534, 0.0
      %v2581 = vadd.f32 %v2579, %v2580
      %v2582 = vrot.slane %v2581, 4
      %v2583 = vadd.f32 %v2581, %v2582
      %v2584 = vrot.slane %v2583, 2
      %v2585 = vadd.f32 %v2583, %v2584
      %v2586 = vrot.slane %v2585, 1
      %v2587 = vadd.f32 %v2585, %v2586
      %v2588 = vsel %vm683, %v2535, 0.0
      %v2589 = vsel %vm683, %v2536, 0.0
      %v2590 = vadd.f32 %v2588, %v2589
      %v2591 = vrot.slane %v2590, 4
      %v2592 = vadd.f32 %v2590, %v2591
      %v2593 = vrot.slane %v2592, 2
      %v2594 = vadd.f32 %v2592, %v2593
      %v2595 = vrot.slane %v2594, 1
      %v2596 = vadd.f32 %v2594, %v2595
      %v2597 = vsel %vm683, %v2537, 0.0
      %v2598 = vsel %vm683, %v2538, 0.0
      %v2599 = vadd.f32 %v2597, %v2598
      %v2600 = vrot.slane %v2599, 4
      %v2601 = vadd.f32 %v2599, %v2600
      %v2602 = vrot.slane %v2601, 2
      %v2603 = vadd.f32 %v2601, %v2602
      %v2604 = vrot.slane %v2603, 1
      %v2605 = vadd.f32 %v2603, %v2604
      %v2606 = vsel %vm683, %v2539, 0.0
      %v2607 = vsel %vm683, %v2540, 0.0
      %v2608 = vadd.f32 %v2606, %v2607
      %v2609 = vrot.slane %v2608, 4
      %v2610 = vadd.f32 %v2608, %v2609
      %v2611 = vrot.slane %v2610, 2
      %v2612 = vadd.f32 %v2610, %v2611
      %v2613 = vrot.slane %v2612, 1
      %v2614 = vadd.f32 %v2612, %v2613
      %v2615 = vsel %vm683, %v2541, 0.0
      %v2616 = vsel %vm683, %v2542, 0.0
      %v2617 = vadd.f32 %v2615, %v2616
      %v2618 = vrot.slane %v2617, 4
      %v2619 = vadd.f32 %v2617, %v2618
      %v2620 = vrot.slane %v2619, 2
      %v2621 = vadd.f32 %v2619, %v2620
      %v2622 = vrot.slane %v2621, 1
      %v2623 = vadd.f32 %v2621, %v2622
      %v2624 = vsel %vm683, %v2543, 0.0
      %v2625 = vsel %vm683, %v2544, 0.0
      %v2626 = vadd.f32 %v2624, %v2625
      %v2627 = vrot.slane %v2626, 4
      %v2628 = vadd.f32 %v2626, %v2627
      %v2629 = vrot.slane %v2628, 2
      %v2630 = vadd.f32 %v2628, %v2629
      %v2631 = vrot.slane %v2630, 1
      %v2632 = vadd.f32 %v2630, %v2631
      %v2633 = vsel %vm683, %v2545, 0.0
      %v2634 = vsel %vm683, %v2546, 0.0
      %v2635 = vadd.f32 %v2633, %v2634
      %v2636 = vrot.slane %v2635, 4
      %v2637 = vadd.f32 %v2635, %v2636
      %v2638 = vrot.slane %v2637, 2
      %v2639 = vadd.f32 %v2637, %v2638
      %v2640 = vrot.slane %v2639, 1
      %v2641 = vadd.f32 %v2639, %v2640
      %v2642 = vsel %vm683, %v2547, 0.0
      %v2643 = vsel %vm683, %v2548, 0.0
      %v2644 = vadd.f32 %v2642, %v2643
      %v2645 = vrot.slane %v2644, 4
      %v2646 = vadd.f32 %v2644, %v2645
      %v2647 = vrot.slane %v2646, 2
      %v2648 = vadd.f32 %v2646, %v2647
      %v2649 = vrot.slane %v2648, 1
      %v2650 = vadd.f32 %v2648, %v2649
      %v2651 = vsel %vm683, %v2549, 0.0
      %v2652 = vsel %vm683, %v2550, 0.0
      %v2653 = vadd.f32 %v2651, %v2652
      %v2654 = vrot.slane %v2653, 4
      %v2655 = vadd.f32 %v2653, %v2654
      %v2656 = vrot.slane %v2655, 2
      %v2657 = vadd.f32 %v2655, %v2656
      %v2658 = vrot.slane %v2657, 1
      %v2659 = vadd.f32 %v2657, %v2658
      %v2660 = vsel %vm683, %v2551, 0.0
      %v2661 = vsel %vm683, %v2552, 0.0
      %v2662 = vadd.f32 %v2660, %v2661
      %v2663 = vrot.slane %v2662, 4
      %v2664 = vadd.f32 %v2662, %v2663
      %v2665 = vrot.slane %v2664, 2
      %v2666 = vadd.f32 %v2664, %v2665
      %v2667 = vrot.slane %v2666, 1
      %v2668 = vadd.f32 %v2666, %v2667
      %v2669 = vsel %vm683, %v2553, 0.0
      %v2670 = vsel %vm683, %v2554, 0.0
      %v2671 = vadd.f32 %v2669, %v2670
      %v2672 = vrot.slane %v2671, 4
      %v2673 = vadd.f32 %v2671, %v2672
      %v2674 = vrot.slane %v2673, 2
      %v2675 = vadd.f32 %v2673, %v2674
      %v2676 = vrot.slane %v2675, 1
      %v2677 = vadd.f32 %v2675, %v2676
      %v2678 = vsel %vm683, %v2555, 0.0
      %v2679 = vsel %vm683, %v2556, 0.0
      %v2680 = vadd.f32 %v2678, %v2679
      %v2681 = vrot.slane %v2680, 4
      %v2682 = vadd.f32 %v2680, %v2681
      %v2683 = vrot.slane %v2682, 2
      %v2684 = vadd.f32 %v2682, %v2683
      %v2685 = vrot.slane %v2684, 1
      %v2686 = vadd.f32 %v2684, %v2685
      %v2687 = vsel %vm683, %v2557, 0.0
      %v2688 = vsel %vm683, %v2558, 0.0
      %v2689 = vadd.f32 %v2687, %v2688
      %v2690 = vrot.slane %v2689, 4
      %v2691 = vadd.f32 %v2689, %v2690
      %v2692 = vrot.slane %v2691, 2
      %v2693 = vadd.f32 %v2691, %v2692
      %v2694 = vrot.slane %v2693, 1
      %v2695 = vadd.f32 %v2693, %v2694
      %v2696 = vsel %vm683, %v2559, 0.0
      %v2697 = vsel %vm683, %v2560, 0.0
      %v2698 = vadd.f32 %v2696, %v2697
      %v2699 = vrot.slane %v2698, 4
      %v2700 = vadd.f32 %v2698, %v2699
      %v2701 = vrot.slane %v2700, 2
      %v2702 = vadd.f32 %v2700, %v2701
      %v2703 = vrot.slane %v2702, 1
      %v2704 = vadd.f32 %v2702, %v2703
      %v2705 = vld [vmem:[%s7] sm:$0xff]
      %v2706 = vld [vmem:[%s7 + $0x8] sm:$0xff]
      %v2707 = vld [vmem:[%s7 + $0x10] sm:$0xff]
      %v2708 = vld [vmem:[%s7 + $0x18] sm:$0xff]
      %v2709 = vld [vmem:[%s7 + $0x20] sm:$0xff]
      %v2710 = vld [vmem:[%s7 + $0x28] sm:$0xff]
      %v2711 = vld [vmem:[%s7 + $0x30] sm:$0xff]
      %v2712 = vld [vmem:[%s7 + $0x38] sm:$0xff]
      %v2713 = vld [vmem:[%s8] sm:$0x1]
      %v2715 = vlaneseq
      %v2716 = vshrl.u32 %v2715, 7
      %v2717 = vsub.s32 0, %v2716
      %v2718 = vrot.slane %v2713, %v2717
      %vm2736 = vcmask 1041409
      %v2737 = vsel %vm2736, %v2578, %v2569
      %vm2738 = vcmask 1042434
      %v2739 = vsel %vm2738, %v2587, %v2737
      %vm2740 = vcmask 1043459
      %v2741 = vsel %vm2740, %v2596, %v2739
      %vm2742 = vcmask 1044484
      %v2743 = vsel %vm2742, %v2605, %v2741
      %vm2744 = vcmask 1045509
      %v2745 = vsel %vm2744, %v2614, %v2743
      %vm2746 = vcmask 1046534
      %v2747 = vsel %vm2746, %v2623, %v2745
      %vm2748 = vcmask 1047559
      %v2749 = vsel %vm2748, %v2632, %v2747
      %v2750 = vsel %vm2736, %v2650, %v2641
      %v2751 = vsel %vm2738, %v2659, %v2750
      %v2752 = vsel %vm2740, %v2668, %v2751
      %v2753 = vsel %vm2742, %v2677, %v2752
      %v2754 = vsel %vm2744, %v2686, %v2753
      %v2755 = vsel %vm2746, %v2695, %v2754
      %v2756 = vsel %vm2748, %v2704, %v2755
      %v2757 = vsel %vm683, %v2749, 0
      %v2759 = vsel %vm683, %v2756, 0
      %2761 = vmatprep.subr.mxu0 0.0
      %2762 = vmatpush1.msra.mxu0 %v2705
      %2763 = vmatprep.subr.mxu0 0.0
      %2764 = vmatpush1.msra.mxu0 %v2706
      %2765 = vmatprep.subr.mxu0 0.0
      %2766 = vmatpush1.msra.mxu0 %v2707
      %2767 = vmatprep.subr.mxu0 0.0
      %2768 = vmatpush1.msra.mxu0 %v2708
      %2769 = vmatprep.subr.mxu0 0.0
      %2770 = vmatpush1.msra.mxu0 %v2709
      %2771 = vmatprep.subr.mxu0 0.0
      %2772 = vmatpush1.msra.mxu0 %v2710
      %2773 = vmatprep.subr.mxu0 0.0
      %2774 = vmatpush1.msra.mxu0 %v2711
      %2775 = vmatprep.subr.mxu0 0.0
      %2776 = vmatpush1.msra.mxu0 %v2712
      %2777 = vmatprep.subr.mxu0 0.0
      %2778 = vmatpush1.msra.mxu0 0.0
      %2779 = vmatprep.subr.mxu0 0.0
      %2780 = vmatpush1.msra.mxu0 0.0
      %2781 = vmatprep.subr.mxu0 0.0
      %2782 = vmatpush1.msra.mxu0 0.0
      %2783 = vmatprep.subr.mxu0 0.0
      %2784 = vmatpush1.msra.mxu0 0.0
      %2785 = vmatprep.subr.mxu0 0.0
      %2786 = vmatpush1.msra.mxu0 0.0
      %2787 = vmatprep.subr.mxu0 0.0
      %2788 = vmatpush1.msra.mxu0 0.0
      %2789 = vmatprep.subr.mxu0 0.0
      %2790 = vmatpush1.msra.mxu0 0.0
      %2791 = vmatprep.subr.mxu0 0.0
      %2792 = vmatpush1.msra.mxu0 0.0
      %2793 = vmatprep.subr.mxu0 0.0
      %2794 = vmatpush1.msra.mxu0 0.0
      %2795 = vmatprep.subr.mxu0 0.0
      %2796 = vmatpush1.msra.mxu0 0.0
      %2797 = vmatprep.subr.mxu0 0.0
      %2798 = vmatpush1.msra.mxu0 0.0
      %2799 = vmatprep.subr.mxu0 0.0
      %2800 = vmatpush1.msra.mxu0 0.0
      %2801 = vmatprep.subr.mxu0 0.0
      %2802 = vmatpush1.msra.mxu0 0.0
      %2803 = vmatprep.subr.mxu0 0.0
      %2804 = vmatpush1.msra.mxu0 0.0
      %2805 = vmatprep.subr.mxu0 0.0
      %2806 = vmatpush1.msra.mxu0 0.0
      %2807 = vmatprep.subr.mxu0 0.0
      %2808 = vmatpush1.msra.mxu0 0.0
      %2809 = vmatprep.subr.mxu0 0.0
      %2810 = vmatpush1.msra.mxu0 0.0
      %2811 = vmatprep.subr.mxu0 0.0
      %2812 = vmatpush1.msra.mxu0 0.0
      %2813 = vmatprep.subr.mxu0 0.0
      %2814 = vmatpush1.msra.mxu0 0.0
      %2815 = vmatprep.subr.mxu0 0.0
      %2816 = vmatpush1.msra.mxu0 0.0
      %2817 = vmatprep.subr.mxu0 0.0
      %2818 = vmatpush1.msra.mxu0 0.0
      %2819 = vmatprep.subr.mxu0 0.0
      %2820 = vmatpush1.msra.mxu0 0.0
      %2821 = vmatprep.subr.mxu0 0.0
      %2822 = vmatpush1.msra.mxu0 0.0
      %2823 = vmatprep.subr.mxu0 0.0
      %2824 = vmatpush1.msra.mxu0 0.0
      %2825 = vmatprep.mubr.f32.mxu0 0.0
      %2826 = vmatmul.mubr.f32.gmra.mrb[0].mxu0 %v2757
      %v2827 = vpop.f32.mrb[0].mxu0
      %v2828 = vadd.f32 %v2718, %v2827
      %v2829 = vpop.f32.mrb[0].mxu0
      %2830 = vmatprep.mubr.f32.mxu0 0.0
      %2831 = vmatmul.mubr.f32.gmra.mrb[0].mxu0 %v2759
      %v2832 = vpop.f32.mrb[0].mxu0
      %v2833 = vadd.f32 %v2718, %v2832
      %v2834 = vpop.f32.mrb[0].mxu0
      %2835 = vdwg.mxu0
      %v2868 = vlaneseq
      %v2869 = vand.u32 %v2868, 127
      %v2870 = vadd.s32 %v2869, 4294967264
      %v2871 = vlaneseq
      %v2872 = vshrl.u32 %v2871, 7
      %v2873 = vsub.s32 %v2870, %v2872
      %v2874 = vrot.slane %v2171, %v2873
      %v2875 = vadd.s32 %v2869, 4294967256
      %v2876 = vlaneseq
      %v2877 = vshrl.u32 %v2876, 7
      %v2878 = vsub.s32 %v2875, %v2877
      %v2879 = vrot.slane %v2172, %v2878
      %vm2880 = vcmask 392512
      %v2881 = vsel %vm2880, %v2879, %v2874
      %v2882 = vlaneseq
      %v2883 = vshrl.u32 %v2882, 7
      %v2884 = vsub.s32 %v2870, %v2883
      %v2885 = vrot.slane %v2173, %v2884
      %v2886 = vlaneseq
      %v2887 = vshrl.u32 %v2886, 7
      %v2888 = vsub.s32 %v2875, %v2887
      %v2889 = vrot.slane %v2174, %v2888
      %v2890 = vsel %vm2880, %v2889, %v2885
      %v2891 = vlaneseq
      %v2892 = vshrl.u32 %v2891, 7
      %v2893 = vsub.s32 %v2870, %v2892
      %v2894 = vrot.slane %v2175, %v2893
      %v2895 = vlaneseq
      %v2896 = vshrl.u32 %v2895, 7
      %v2897 = vsub.s32 %v2875, %v2896
      %v2898 = vrot.slane %v2176, %v2897
      %v2899 = vsel %vm2880, %v2898, %v2894
      %v2900 = vlaneseq
      %v2901 = vshrl.u32 %v2900, 7
      %v2902 = vsub.s32 %v2870, %v2901
      %v2903 = vrot.slane %v2177, %v2902
      %v2904 = vlaneseq
      %v2905 = vshrl.u32 %v2904, 7
      %v2906 = vsub.s32 %v2875, %v2905
      %v2907 = vrot.slane %v2178, %v2906
      %v2908 = vsel %vm2880, %v2907, %v2903
      %v2909 = vlaneseq
      %v2910 = vshrl.u32 %v2909, 7
      %v2911 = vsub.s32 %v2870, %v2910
      %v2912 = vrot.slane %v2179, %v2911
      %v2913 = vlaneseq
      %v2914 = vshrl.u32 %v2913, 7
      %v2915 = vsub.s32 %v2875, %v2914
      %v2916 = vrot.slane %v2180, %v2915
      %v2917 = vsel %vm2880, %v2916, %v2912
      %v2918 = vlaneseq
      %v2919 = vshrl.u32 %v2918, 7
      %v2920 = vsub.s32 %v2870, %v2919
      %v2921 = vrot.slane %v2181, %v2920
      %v2922 = vlaneseq
      %v2923 = vshrl.u32 %v2922, 7
      %v2924 = vsub.s32 %v2875, %v2923
      %v2925 = vrot.slane %v2182, %v2924
      %v2926 = vsel %vm2880, %v2925, %v2921
      %v2927 = vlaneseq
      %v2928 = vshrl.u32 %v2927, 7
      %v2929 = vsub.s32 %v2870, %v2928
      %v2930 = vrot.slane %v2183, %v2929
      %v2931 = vlaneseq
      %v2932 = vshrl.u32 %v2931, 7
      %v2933 = vsub.s32 %v2875, %v2932
      %v2934 = vrot.slane %v2184, %v2933
      %v2935 = vsel %vm2880, %v2934, %v2930
      %v2936 = vlaneseq
      %v2937 = vshrl.u32 %v2936, 7
      %v2938 = vsub.s32 %v2870, %v2937
      %v2939 = vrot.slane %v2185, %v2938
      %v2940 = vlaneseq
      %v2941 = vshrl.u32 %v2940, 7
      %v2942 = vsub.s32 %v2875, %v2941
      %v2943 = vrot.slane %v2186, %v2942
      %v2944 = vsel %vm2880, %v2943, %v2939
      %v2945 = vlaneseq
      %v2946 = vshrl.u32 %v2945, 7
      %v2947 = vsub.s32 %v2870, %v2946
      %v2948 = vrot.slane %v2187, %v2947
      %v2949 = vlaneseq
      %v2950 = vshrl.u32 %v2949, 7
      %v2951 = vsub.s32 %v2875, %v2950
      %v2952 = vrot.slane %v2188, %v2951
      %v2953 = vsel %vm2880, %v2952, %v2948
      %v2954 = vlaneseq
      %v2955 = vshrl.u32 %v2954, 7
      %v2956 = vsub.s32 %v2870, %v2955
      %v2957 = vrot.slane %v2189, %v2956
      %v2958 = vlaneseq
      %v2959 = vshrl.u32 %v2958, 7
      %v2960 = vsub.s32 %v2875, %v2959
      %v2961 = vrot.slane %v2190, %v2960
      %v2962 = vsel %vm2880, %v2961, %v2957
      %v2963 = vlaneseq
      %v2964 = vshrl.u32 %v2963, 7
      %v2965 = vsub.s32 %v2870, %v2964
      %v2966 = vrot.slane %v2191, %v2965
      %v2967 = vlaneseq
      %v2968 = vshrl.u32 %v2967, 7
      %v2969 = vsub.s32 %v2875, %v2968
      %v2970 = vrot.slane %v2192, %v2969
      %v2971 = vsel %vm2880, %v2970, %v2966
      %v2972 = vlaneseq
      %v2973 = vshrl.u32 %v2972, 7
      %v2974 = vsub.s32 %v2870, %v2973
      %v2975 = vrot.slane %v2193, %v2974
      %v2976 = vlaneseq
      %v2977 = vshrl.u32 %v2976, 7
      %v2978 = vsub.s32 %v2875, %v2977
      %v2979 = vrot.slane %v2194, %v2978
      %v2980 = vsel %vm2880, %v2979, %v2975
      %v2981 = vlaneseq
      %v2982 = vshrl.u32 %v2981, 7
      %v2983 = vsub.s32 %v2870, %v2982
      %v2984 = vrot.slane %v2195, %v2983
      %v2985 = vlaneseq
      %v2986 = vshrl.u32 %v2985, 7
      %v2987 = vsub.s32 %v2875, %v2986
      %v2988 = vrot.slane %v2196, %v2987
      %v2989 = vsel %vm2880, %v2988, %v2984
      %v2990 = vlaneseq
      %v2991 = vshrl.u32 %v2990, 7
      %v2992 = vsub.s32 %v2870, %v2991
      %v2993 = vrot.slane %v2197, %v2992
      %v2994 = vlaneseq
      %v2995 = vshrl.u32 %v2994, 7
      %v2996 = vsub.s32 %v2875, %v2995
      %v2997 = vrot.slane %v2198, %v2996
      %v2998 = vsel %vm2880, %v2997, %v2993
      %v2999 = vlaneseq
      %v3000 = vshrl.u32 %v2999, 7
      %v3001 = vsub.s32 %v2870, %v3000
      %v3002 = vrot.slane %v2199, %v3001
      %v3003 = vlaneseq
      %v3004 = vshrl.u32 %v3003, 7
      %v3005 = vsub.s32 %v2875, %v3004
      %v3006 = vrot.slane %v2200, %v3005
      %v3007 = vsel %vm2880, %v3006, %v3002
      %v3008 = vlaneseq
      %v3009 = vshrl.u32 %v3008, 7
      %v3010 = vsub.s32 %v2870, %v3009
      %v3011 = vrot.slane %v2201, %v3010
      %v3012 = vlaneseq
      %v3013 = vshrl.u32 %v3012, 7
      %v3014 = vsub.s32 %v2875, %v3013
      %v3015 = vrot.slane %v2202, %v3014
      %v3016 = vsel %vm2880, %v3015, %v3011
      %v3017 = vsel %vm2736, %v2890, %v2881
      %v3018 = vsel %vm2738, %v2899, %v3017
      %v3019 = vsel %vm2740, %v2908, %v3018
      %v3020 = vsel %vm2742, %v2917, %v3019
      %v3021 = vsel %vm2744, %v2926, %v3020
      %v3022 = vsel %vm2746, %v2935, %v3021
      %v3023 = vsel %vm2748, %v2944, %v3022
      %v3024 = vsel %vm2736, %v2962, %v2953
      %v3025 = vsel %vm2738, %v2971, %v3024
      %v3026 = vsel %vm2740, %v2980, %v3025
      %v3027 = vsel %vm2742, %v2989, %v3026
      %v3028 = vsel %vm2744, %v2998, %v3027
      %v3029 = vsel %vm2746, %v3007, %v3028
      %v3030 = vsel %vm2748, %v3016, %v3029
      %v3033 = vsel %vm482, %v2828, %v3023
      %v3034 = vsel %vm482, %v2833, %v3030
      %vm3035 = vcmask 392192
      %3036 = vst.msk [vmem:[%s432] sm:$0xff] %vm3035, %v3033
      %3037 = vst.msk [vmem:[%s432 + $0x8] sm:$0xff] %vm3035, %v3034
      %s3038 = smul.u32 2, %s22
      %p3039 = scmp.lt.s32.totalorder %s3038, 7
      %s3040 = scalar_select %p3039, %s3038, 7
      %s3041 = smul.addr %s3040, 8
      %s3042 = scalar_lea.vmem %s11, %s3041
      // Predicated region
      $region65: #{temporal_attention_forward.1} parent=63 // pred_check
        %p3043 = pneg %p286
      $region66: #{temporal_attention_forward.1} parent=63 // pred_check_branch
        %3045 = sbr.rel (%p3043) target = $region68
      $region67: #{temporal_attention_forward.1} parent=63 // pred_region
        %s3046 = smul.u32 2, %s22
      $region68: #{temporal_attention_forward.1} parent=63 // pred_fallthru
        _
    $region64: #{temporal_attention_forward.1} parent=5 // pred_fallthru
      _
    %p3047 = scmp.le.s32.totalorder 2, %s17
    // Predicated region
    $region69: #{temporal_attention_forward.1} parent=5 // pred_check
      %p3048 = pneg %p3047
    $region70: #{temporal_attention_forward.1} parent=5 // pred_check_branch
      %3050 = sbr.rel (%p3048) target = $region72
    $region71: #{temporal_attention_forward.1} parent=5 // pred_region
      %s3051 = ssub.s32 %s17, 2
      // Predicated region
      $region73: #{temporal_attention_forward.1} parent=71 // pred_check
        %p3052 = pneg %p292
      $region74: #{temporal_attention_forward.1} parent=71 // pred_check_branch
        %3054 = sbr.rel (%p3052) target = $region76
      $region75: #{temporal_attention_forward.1} parent=71 // pred_region
        %s3055 = smul.u32 2, %s23
        %p3056 = scmp.lt.s32.totalorder %s3055, 7
        %s3057 = scalar_select %p3056, %s3055, 7
        %s3058 = smul.addr %s3057, 8
        %s3059 = scalar_lea.vmem %s11, %s3058
      $region76: #{temporal_attention_forward.1} parent=71 // pred_fallthru
        _
    $region72: #{temporal_attention_forward.1} parent=5 // pred_fallthru
      _
  $region6: #{temporal_attention_forward.1} parent=0 // loop_footer
    %s21 = sadd.s32 1, %s17
  $region7: #{temporal_attention_forward.1} parent=0 // loop_footer_branch
    %16 = sbr.rel target = $region3
  $region8: #{temporal_attention_forward.1} parent=0 // loop_exit
    _

</llo_original>
